<compile_context>
chip_gen: v5e
topology: v5e:2x2
jax: 0.10.0
libtpu: 0.0.40
codegen_flags: <defaults>
</compile_context>

<pallas_src>
import math

import jax
import jax.numpy as jnp
from jax.experimental import pallas as pl
from jax.experimental.pallas import tpu as pltpu

# ---------------- configuration (small, consistent with the module) ----------
B = 2            # batch
DEPTH = 8        # number of axial slices (LSTM sequence length)
H = W = 16       # spatial size
IN_CHANNELS = 3  # cfg.model.in_channels == slice_size of SlidingSlicer
HID = 32         # backbone num_features == LSTM hidden size
NUM_CLASSES = 6

HW = H * W
TB = B * DEPTH   # rows of the batch-major input slab (row m = b*DEPTH + d)


def _vspec(shape):
  zeros = (0,) * len(shape)
  return pl.BlockSpec(shape, lambda i, _z=zeros: _z)


# ---------------- fused kernel: stem + backbone + biLSTM + attention + fc ----
def fused_kernel(x_ref,      # (B*T, H*W)   batch-major input rows
                 w0_ref,     # (H*W, HID)   backbone weight for stem channel 0 (prev slice)
                 w1_ref,     # (H*W, HID)   ... channel 1 (current slice)
                 w2_ref,     # (H*W, HID)   ... channel 2 (next slice)
                 bfeat_ref,  # (1, HID)
                 wihf_ref,   # (HID, 8*HID) fwd input->gates, spread to fused gate layout
                 wihb_ref,   # (HID, 8*HID) bwd input->gates, spread to fused gate layout
                 bg_ref,     # (1, 8*HID)   combined (b_ih + b_hh) gate bias, both dirs
                 whh_ref,    # (2*HID, 8*HID) block-diagonal hidden->gates, both dirs
                 watt_ref,   # (2*HID, 1)   attention Linear(2H->1) weight (bias is a softmax no-op)
                 wfc_ref,    # (2*HID, NUM_CLASSES)
                 bfc_ref,    # (1, NUM_CLASSES)
                 out_ref):   # (B, NUM_CLASSES)
  T, Bk, Hk = DEPTH, B, HID

  # --- stage 1: SlidingSlicer stem folded into the backbone Linear + ReLU ----
  # feats[b, d] = relu(x[b, d-1]@W0 + x[b, d]@W1 + x[b, d+1]@W2 + bias), with
  # zero padding at the per-batch depth borders.  The +-1 depth shift is a
  # sublane shift done entirely in vregs (slice + concat) and the per-batch
  # borders are masked with a depth-index iota (d = row % DEPTH, batch-major).
  x = x_ref[...]                                                       # (TB, HW)
  y0 = jnp.dot(x, w0_ref[...], preferred_element_type=jnp.float32)    # (TB, HID)
  y1 = jnp.dot(x, w1_ref[...], preferred_element_type=jnp.float32)
  y2 = jnp.dot(x, w2_ref[...], preferred_element_type=jnp.float32)

  d_idx = jax.lax.broadcasted_iota(jnp.int32, (TB, Hk), 0) % T
  zrow = jnp.zeros((1, Hk), jnp.float32)
  prev = jnp.concatenate([zrow, y0[:-1, :]], axis=0)                   # row m <- y0[m-1]
  nxt = jnp.concatenate([y2[1:, :], zrow], axis=0)                     # row m <- y2[m+1]
  prev = jnp.where(d_idx == 0, 0.0, prev)                              # zero pad at d == 0
  nxt = jnp.where(d_idx == T - 1, 0.0, nxt)                            # zero pad at d == T-1
  feats = jnp.maximum(y1 + prev + nxt + bfeat_ref[...], 0.0)           # (TB, HID)

  # --- stage 2: biLSTM, fwd + bwd fused into one matmul per step -------------
  # Fused gate column layout (32 lanes each):
  #   [i_f i_b f_f f_b o_f o_b | g_f g_b]   -> one sigmoid(192 lanes) + one tanh(64)
  # State layout: hc / cc = [fwd(0:32) | bwd(32:64)], matching the gate slices.
  gxf = jnp.dot(feats, wihf_ref[...],
                preferred_element_type=jnp.float32) + bg_ref[...]      # (TB, 8H)
  gxb = jnp.dot(feats, wihb_ref[...],
                preferred_element_type=jnp.float32)                    # (TB, 8H)
  whh = whh_ref[...]                                                   # (2H, 8H)

  def pick(arr, d):
    # rows {b*DEPTH + d} of a batch-major (B*T, N) value -> (B, N); d is static.
    return jnp.concatenate(
        [arr[b * T + d:b * T + d + 1, :] for b in range(Bk)], axis=0)

  hc = jnp.zeros((Bk, 2 * Hk), jnp.float32)                            # [h_f | h_b]
  cc = jnp.zeros((Bk, 2 * Hk), jnp.float32)                            # [c_f | c_b]
  hs_f = [None] * T
  hs_b = [None] * T

  for t in range(T):                                   # fully unrolled, T static & tiny
    tb = T - 1 - t
    # input-side gate contribution (off the serial chain): fwd at depth t,
    # bwd at depth T-1-t; the "spread" weights make this a single add.
    gates = pick(gxf, t) + pick(gxb, tb)                               # (B, 8H)
    if t > 0:
      gates = gates + jnp.dot(hc, whh, preferred_element_type=jnp.float32)
    sig = jax.nn.sigmoid(gates[:, :6 * Hk])            # [i_f i_b f_f f_b o_f o_b]
    g = jnp.tanh(gates[:, 6 * Hk:])                    # [g_f g_b]
    cc = sig[:, 2 * Hk:4 * Hk] * cc + sig[:, 0:2 * Hk] * g
    hc = sig[:, 4 * Hk:6 * Hk] * jnp.tanh(cc)
    hs_f[t] = hc[:, :Hk]                               # fwd hidden at depth t
    hs_b[tb] = hc[:, Hk:]                              # bwd hidden at depth T-1-t

  # --- stage 3: attention pooling over depth + final fc ----------------------
  # h_all row (d*B + b) = [h_f(b, d) | h_b(b, d)], built from vregs (no scratch).
  h_all = jnp.concatenate(
      [jnp.concatenate([hs_f[d], hs_b[d]], axis=1) for d in range(T)],
      axis=0)                                                          # (T*B, 2H)
  s = jnp.dot(h_all, watt_ref[...], preferred_element_type=jnp.float32)  # (T*B, 1) MXU matvec
  b_idx = jax.lax.broadcasted_iota(jnp.int32, (T * Bk, 1), 0) % Bk     # batch id per row

  pooled = []
  for b in range(Bk):                                  # B == 2, unrolled
    sb = jnp.where(b_idx == b, s, -jnp.inf)            # other batch's rows -> -inf
    m = jnp.max(sb, axis=(0, 1), keepdims=True)
    e = jnp.exp(sb - m)                                # exp(-inf) == 0 on other rows
    a = e / jnp.sum(e, axis=(0, 1), keepdims=True)     # softmax over depth
    pooled.append(jnp.sum(a * h_all, axis=0, keepdims=True))          # (1, 2H)
  pooled = jnp.concatenate(pooled, axis=0)                             # (B, 2H)

  out_ref[...] = (jnp.dot(pooled, wfc_ref[...],
                          preferred_element_type=jnp.float32) + bfc_ref[...])


def axial_cls_fused_call(x_bd, params):
  return pl.pallas_call(
      fused_kernel,
      out_shape=jax.ShapeDtypeStruct((B, NUM_CLASSES), jnp.float32),
      grid=(1,),
      in_specs=[
          _vspec((TB, HW)),
          _vspec((HW, HID)), _vspec((HW, HID)), _vspec((HW, HID)),
          _vspec((1, HID)),
          _vspec((HID, 8 * HID)), _vspec((HID, 8 * HID)),
          _vspec((1, 8 * HID)),
          _vspec((2 * HID, 8 * HID)),
          _vspec((2 * HID, 1)),
          _vspec((2 * HID, NUM_CLASSES)),
          _vspec((1, NUM_CLASSES)),
      ],
      out_specs=_vspec((B, NUM_CLASSES)),
      compiler_params=pltpu.CompilerParams(
          dimension_semantics=("arbitrary",)),
  )(x_bd,
    params["w0"], params["w1"], params["w2"], params["b_feat"],
    params["wih_f"], params["wih_b"], params["b_gates"], params["whh"],
    params["w_att"], params["w_fc"], params["b_fc"])


# ---------------- parameter construction (deterministic) ---------------------
def make_params(key):
  def uinit(k, shape, fan_in):
    bound = 1.0 / math.sqrt(fan_in)
    return jax.random.uniform(k, shape, jnp.float32, -bound, bound)

  ks = jax.random.split(key, 12)
  fin = IN_CHANNELS * HW

  # Backbone substitute: Linear(C*H*W -> HID) + ReLU on the NCHW-flattened
  # stem slice; rows ordered (channel, h, w), channel i = depth offset i-1.
  # TODO(synk): stands in for the timm backbone (cannot be replicated here).
  w_feat = uinit(ks[0], (fin, HID), fin)
  b_feat = uinit(ks[1], (1, HID), fin)
  w0 = w_feat[0 * HW:1 * HW, :]     # prev-slice channel
  w1 = w_feat[1 * HW:2 * HW, :]     # current slice
  w2 = w_feat[2 * HW:3 * HW, :]     # next-slice channel

  # biLSTM per-direction weights; per-direction gate column order [i f o g]
  # (our own deterministic init -> the ordering convention is free; a repack
  #  shim would be needed to load real PyTorch LSTM checkpoints).
  wih_f = uinit(ks[2], (HID, 4 * HID), HID)
  whh_f = uinit(ks[3], (HID, 4 * HID), HID)
  b_f = uinit(ks[4], (1, 4 * HID), HID)     # b_ih + b_hh combined
  wih_b = uinit(ks[5], (HID, 4 * HID), HID)
  whh_b = uinit(ks[6], (HID, 4 * HID), HID)
  b_b = uinit(ks[7], (1, 4 * HID), HID)

  # Spread a per-direction (rows, 4H) gate matrix into the fused 8H layout
  # [i_f i_b f_f f_b o_f o_b g_f g_b]; direction 0 = fwd slots, 1 = bwd slots.
  def spread(w4, direction):
    rows = w4.shape[0]
    out = jnp.zeros((rows, 8 * HID), jnp.float32)
    for gi in range(4):                       # i, f, o, g
      col = (2 * gi + direction) * HID
      out = out.at[:, col:col + HID].set(w4[:, gi * HID:(gi + 1) * HID])
    return out

  wih_f_p = spread(wih_f, 0)                                  # (HID, 8H)
  wih_b_p = spread(wih_b, 1)                                  # (HID, 8H)
  b_gates = spread(b_f, 0) + spread(b_b, 1)                   # (1, 8H)
  whh_p = jnp.concatenate([spread(whh_f, 0), spread(whh_b, 1)], axis=0)  # (2H, 8H) block-diag

  # Attention pooling Linear(2H -> 1) weight (bias dropped: softmax no-op).
  w_att = uinit(ks[8], (2 * HID, 1), 2 * HID)
  # Final fc Linear(2H -> 6); dropout == identity in eval mode.
  w_fc = uinit(ks[10], (2 * HID, NUM_CLASSES), 2 * HID)
  b_fc = uinit(ks[11], (1, NUM_CLASSES), 2 * HID)

  packed = {
      "w0": w0, "w1": w1, "w2": w2, "b_feat": b_feat,
      "wih_f": wih_f_p, "wih_b": wih_b_p, "b_gates": b_gates, "whh": whh_p,
      "w_att": w_att, "w_fc": w_fc, "b_fc": b_fc,
  }
  raw = {
      "w_feat": w_feat, "b_feat": b_feat,
      "wih_f": wih_f, "whh_f": whh_f, "b_f": b_f,
      "wih_b": wih_b, "whh_b": whh_b, "b_b": b_b,
      "w_att": w_att, "w_fc": w_fc, "b_fc": b_fc,
  }
  return packed, raw


# ---------------- full forward ------------------------------------------------
@jax.jit
def axial_cls_forward(x, params):
  b, depth, h, w = x.shape
  # Batch-major slab (row m = b*DEPTH + d): a contiguous reshape, no transpose.
  x_bd = x.reshape(b * depth, h * w)
  return axial_cls_fused_call(x_bd, params)


# ---------------- pure-JAX reference (for a self-consistency check) -----------
@jax.jit
def reference_forward(x, raw):
  b, depth, h, w = x.shape
  hw = h * w
  xf = x.reshape(b, depth, hw)
  prev = jnp.concatenate([jnp.zeros((b, 1, hw), x.dtype), xf[:, :-1]], axis=1)
  nxt = jnp.concatenate([xf[:, 1:], jnp.zeros((b, 1, hw), x.dtype)], axis=1)
  stem = jnp.concatenate([prev, xf, nxt], axis=-1)            # (b, depth, 3*hw)
  feats = jax.nn.relu(stem @ raw["w_feat"] + raw["b_feat"])   # (b, depth, HID)

  def lstm_dir(f_seq, wih, whh, bias, reverse):
    hh = jnp.zeros((f_seq.shape[0], HID), jnp.float32)
    cc = jnp.zeros_like(hh)
    outs = [None] * depth
    order = range(depth - 1, -1, -1) if reverse else range(depth)
    for d in order:
      gates = f_seq[:, d] @ wih + hh @ whh + bias
      i = jax.nn.sigmoid(gates[:, :HID])
      f = jax.nn.sigmoid(gates[:, HID:2 * HID])
      o = jax.nn.sigmoid(gates[:, 2 * HID:3 * HID])
      g = jnp.tanh(gates[:, 3 * HID:])
      cc = f * cc + i * g
      hh = o * jnp.tanh(cc)
      outs[d] = hh
    return jnp.stack(outs, axis=1)                            # (b, depth, HID)

  hf = lstm_dir(feats, raw["wih_f"], raw["whh_f"], raw["b_f"], False)
  hb = lstm_dir(feats, raw["wih_b"], raw["whh_b"], raw["b_b"], True)
  hcat = jnp.concatenate([hf, hb], axis=-1)                   # (b, depth, 2H)
  scores = hcat @ raw["w_att"]                                # (b, depth, 1)
  attn = jax.nn.softmax(scores, axis=1)
  pooled = jnp.sum(attn * hcat, axis=1)                       # (b, 2H)
  return pooled @ raw["w_fc"] + raw["b_fc"]


if __name__ == "__main__":
  key = jax.random.PRNGKey(0)
  kx, kp = jax.random.split(key)
  x = jax.random.normal(kx, (B, DEPTH, H, W), jnp.float32)
  params, raw = make_params(kp)

  out = axial_cls_forward(x, params)
  out = jax.block_until_ready(out)
  assert out.shape == (B, NUM_CLASSES), out.shape
  assert bool(jnp.all(jnp.isfinite(out)))

  ref = jax.block_until_ready(reference_forward(x, raw))
  max_err = float(jnp.max(jnp.abs(out - ref)))
  assert max_err < 2e-2, f"kernel/reference mismatch: max abs err {max_err}"

  print("KERNEL_OK")
</pallas_src>

<mosaic_0001>
module attributes {stable_mosaic.version = 11 : i64} {
  func.func @fused_kernel(%arg0: i32, %arg1: memref<16x256xf32, #tpu.memory_space<vmem>>, %arg2: memref<256x32xf32, #tpu.memory_space<vmem>>, %arg3: memref<256x32xf32, #tpu.memory_space<vmem>>, %arg4: memref<256x32xf32, #tpu.memory_space<vmem>>, %arg5: memref<1x32xf32, #tpu.memory_space<vmem>>, %arg6: memref<32x256xf32, #tpu.memory_space<vmem>>, %arg7: memref<32x256xf32, #tpu.memory_space<vmem>>, %arg8: memref<1x256xf32, #tpu.memory_space<vmem>>, %arg9: memref<64x256xf32, #tpu.memory_space<vmem>>, %arg10: memref<64x1xf32, #tpu.memory_space<vmem>>, %arg11: memref<64x6xf32, #tpu.memory_space<vmem>>, %arg12: memref<1x6xf32, #tpu.memory_space<vmem>>, %arg13: memref<2x6xf32, #tpu.memory_space<vmem>>) attributes {dimension_semantics = [#tpu.dimension_semantics<arbitrary>], iteration_bounds = array<i64: 1>, scalar_prefetch = 0 : i64, scratch_operands = 0 : i64, tpu.core_type = #tpu.core_type<tc>, window_params = [{pipeline_mode = #tpu.pipeline_mode<synchronous>, transform_indices = @transform_0, window_bounds = array<i64: 16, 256>}, {pipeline_mode = #tpu.pipeline_mode<synchronous>, transform_indices = @transform_1, window_bounds = array<i64: 256, 32>}, {pipeline_mode = #tpu.pipeline_mode<synchronous>, transform_indices = @transform_2, window_bounds = array<i64: 256, 32>}, {pipeline_mode = #tpu.pipeline_mode<synchronous>, transform_indices = @transform_3, window_bounds = array<i64: 256, 32>}, {pipeline_mode = #tpu.pipeline_mode<synchronous>, transform_indices = @transform_4, window_bounds = array<i64: 1, 32>}, {pipeline_mode = #tpu.pipeline_mode<synchronous>, transform_indices = @transform_5, window_bounds = array<i64: 32, 256>}, {pipeline_mode = #tpu.pipeline_mode<synchronous>, transform_indices = @transform_6, window_bounds = array<i64: 32, 256>}, {pipeline_mode = #tpu.pipeline_mode<synchronous>, transform_indices = @transform_7, window_bounds = array<i64: 1, 256>}, {pipeline_mode = #tpu.pipeline_mode<synchronous>, transform_indices = @transform_8, window_bounds = array<i64: 64, 256>}, {pipeline_mode = #tpu.pipeline_mode<synchronous>, transform_indices = @transform_9, window_bounds = array<i64: 64, 1>}, {pipeline_mode = #tpu.pipeline_mode<synchronous>, transform_indices = @transform_10, window_bounds = array<i64: 64, 6>}, {pipeline_mode = #tpu.pipeline_mode<synchronous>, transform_indices = @transform_11, window_bounds = array<i64: 1, 6>}, {pipeline_mode = #tpu.pipeline_mode<synchronous>, transform_indices = @transform_12, window_bounds = array<i64: 2, 6>}]} {
    %c0 = arith.constant 0 : index
    %c0_0 = arith.constant 0 : index
    %0 = vector.load %arg1[%c0, %c0_0] : memref<16x256xf32, #tpu.memory_space<vmem>>, vector<16x256xf32>
    %c0_1 = arith.constant 0 : index
    %c0_2 = arith.constant 0 : index
    %1 = vector.load %arg2[%c0_1, %c0_2] : memref<256x32xf32, #tpu.memory_space<vmem>>, vector<256x32xf32>
    %cst = arith.constant dense<0.000000e+00> : vector<16x32xf32>
    %2 = tpu.matmul %0, %1, %cst {dimension_numbers = #tpu.dot_dimension_numbers<[1], [0], [0], [1], [0, 0, 1, 1], [], []>} : vector<16x256xf32>, vector<256x32xf32>, vector<16x32xf32> -> vector<16x32xf32>
    %c0_3 = arith.constant 0 : index
    %c0_4 = arith.constant 0 : index
    %3 = vector.load %arg3[%c0_3, %c0_4] : memref<256x32xf32, #tpu.memory_space<vmem>>, vector<256x32xf32>
    %cst_5 = arith.constant dense<0.000000e+00> : vector<16x32xf32>
    %4 = tpu.matmul %0, %3, %cst_5 {dimension_numbers = #tpu.dot_dimension_numbers<[1], [0], [0], [1], [0, 0, 1, 1], [], []>} : vector<16x256xf32>, vector<256x32xf32>, vector<16x32xf32> -> vector<16x32xf32>
    %c0_6 = arith.constant 0 : index
    %c0_7 = arith.constant 0 : index
    %5 = vector.load %arg4[%c0_6, %c0_7] : memref<256x32xf32, #tpu.memory_space<vmem>>, vector<256x32xf32>
    %cst_8 = arith.constant dense<0.000000e+00> : vector<16x32xf32>
    %6 = tpu.matmul %0, %5, %cst_8 {dimension_numbers = #tpu.dot_dimension_numbers<[1], [0], [0], [1], [0, 0, 1, 1], [], []>} : vector<16x256xf32>, vector<256x32xf32>, vector<16x32xf32> -> vector<16x32xf32>
    %7 = tpu.iota {dimensions = array<i32: 0>} : vector<16x32xi32>
    %c8_i32 = arith.constant 8 : i32
    %c0_i32 = arith.constant 0 : i32
    %8 = arith.cmpi eq, %c8_i32, %c0_i32 : i32
    %c1_i32 = arith.constant 1 : i32
    %9 = arith.select %8, %c1_i32, %c8_i32 : i32
    %10 = vector.broadcast %9 : i32 to vector<16x32xi32>
    %11 = arith.remsi %7, %10 : vector<16x32xi32>
    %c0_i32_9 = arith.constant 0 : i32
    %12 = vector.broadcast %c0_i32_9 : i32 to vector<16x32xi32>
    %13 = arith.cmpi ne, %11, %12 : vector<16x32xi32>
    %c0_i32_10 = arith.constant 0 : i32
    %14 = vector.broadcast %c0_i32_10 : i32 to vector<16x32xi32>
    %15 = arith.cmpi slt, %11, %14 : vector<16x32xi32>
    %c0_i32_11 = arith.constant 0 : i32
    %16 = arith.cmpi slt, %9, %c0_i32_11 : i32
    %17 = vector.broadcast %16 : i1 to vector<16x32xi1>
    %18 = vector.broadcast %17 : vector<16x32xi1> to vector<16x32xi1>
    %19 = arith.xori %15, %18 : vector<16x32xi1>
    %20 = arith.andi %19, %13 : vector<16x32xi1>
    %21 = vector.broadcast %9 : i32 to vector<16x32xi32>
    %22 = arith.addi %11, %21 : vector<16x32xi32>
    %23 = arith.select %20, %22, %11 : vector<16x32xi1>, vector<16x32xi32>
    %cst_12 = arith.constant 0.000000e+00 : f32
    %24 = vector.broadcast %cst_12 : f32 to vector<1x32xf32>
    %25 = vector.extract_strided_slice %2 {offsets = [0, 0], sizes = [15, 32], strides = [1, 1]} : vector<16x32xf32> to vector<15x32xf32>
    %26 = tpu.concatenate %24, %25 in 0 : vector<1x32xf32>, vector<15x32xf32> -> vector<16x32xf32>
    %27 = vector.extract_strided_slice %6 {offsets = [1, 0], sizes = [15, 32], strides = [1, 1]} : vector<16x32xf32> to vector<15x32xf32>
    %28 = tpu.concatenate %27, %24 in 0 : vector<15x32xf32>, vector<1x32xf32> -> vector<16x32xf32>
    %c0_i32_13 = arith.constant 0 : i32
    %29 = vector.broadcast %c0_i32_13 : i32 to vector<16x32xi32>
    %30 = arith.cmpi eq, %23, %29 : vector<16x32xi32>
    %cst_14 = arith.constant 0.000000e+00 : f32
    %31 = vector.broadcast %cst_14 : f32 to vector<16x32xf32>
    %32 = arith.select %30, %31, %26 : vector<16x32xi1>, vector<16x32xf32>
    %c7_i32 = arith.constant 7 : i32
    %33 = vector.broadcast %c7_i32 : i32 to vector<16x32xi32>
    %34 = arith.cmpi eq, %23, %33 : vector<16x32xi32>
    %cst_15 = arith.constant 0.000000e+00 : f32
    %35 = vector.broadcast %cst_15 : f32 to vector<16x32xf32>
    %36 = arith.select %34, %35, %28 : vector<16x32xi1>, vector<16x32xf32>
    %37 = arith.addf %4, %32 : vector<16x32xf32>
    %38 = arith.addf %37, %36 : vector<16x32xf32>
    %c0_16 = arith.constant 0 : index
    %c0_17 = arith.constant 0 : index
    %39 = vector.load %arg5[%c0_16, %c0_17] : memref<1x32xf32, #tpu.memory_space<vmem>>, vector<1x32xf32>
    %40 = vector.broadcast %39 : vector<1x32xf32> to vector<16x32xf32>
    %41 = arith.addf %38, %40 : vector<16x32xf32>
    %cst_18 = arith.constant 0.000000e+00 : f32
    %42 = vector.broadcast %cst_18 : f32 to vector<16x32xf32>
    %43 = arith.maximumf %41, %42 : vector<16x32xf32>
    %c0_19 = arith.constant 0 : index
    %c0_20 = arith.constant 0 : index
    %44 = vector.load %arg6[%c0_19, %c0_20] : memref<32x256xf32, #tpu.memory_space<vmem>>, vector<32x256xf32>
    %cst_21 = arith.constant dense<0.000000e+00> : vector<16x256xf32>
    %45 = tpu.matmul %43, %44, %cst_21 {dimension_numbers = #tpu.dot_dimension_numbers<[1], [0], [0], [1], [0, 0, 1, 1], [], []>} : vector<16x32xf32>, vector<32x256xf32>, vector<16x256xf32> -> vector<16x256xf32>
    %c0_22 = arith.constant 0 : index
    %c0_23 = arith.constant 0 : index
    %46 = vector.load %arg8[%c0_22, %c0_23] : memref<1x256xf32, #tpu.memory_space<vmem>>, vector<1x256xf32>
    %47 = vector.broadcast %46 : vector<1x256xf32> to vector<16x256xf32>
    %48 = arith.addf %45, %47 : vector<16x256xf32>
    %c0_24 = arith.constant 0 : index
    %c0_25 = arith.constant 0 : index
    %49 = vector.load %arg7[%c0_24, %c0_25] : memref<32x256xf32, #tpu.memory_space<vmem>>, vector<32x256xf32>
    %cst_26 = arith.constant dense<0.000000e+00> : vector<16x256xf32>
    %50 = tpu.matmul %43, %49, %cst_26 {dimension_numbers = #tpu.dot_dimension_numbers<[1], [0], [0], [1], [0, 0, 1, 1], [], []>} : vector<16x32xf32>, vector<32x256xf32>, vector<16x256xf32> -> vector<16x256xf32>
    %c0_27 = arith.constant 0 : index
    %c0_28 = arith.constant 0 : index
    %51 = vector.load %arg9[%c0_27, %c0_28] : memref<64x256xf32, #tpu.memory_space<vmem>>, vector<64x256xf32>
    %cst_29 = arith.constant 0.000000e+00 : f32
    %52 = vector.broadcast %cst_29 : f32 to vector<2x64xf32>
    %53 = vector.extract_strided_slice %48 {offsets = [0, 0], sizes = [1, 256], strides = [1, 1]} : vector<16x256xf32> to vector<1x256xf32>
    %54 = vector.extract_strided_slice %48 {offsets = [8, 0], sizes = [1, 256], strides = [1, 1]} : vector<16x256xf32> to vector<1x256xf32>
    %55 = tpu.concatenate %53, %54 in 0 : vector<1x256xf32>, vector<1x256xf32> -> vector<2x256xf32>
    %56 = vector.extract_strided_slice %50 {offsets = [7, 0], sizes = [1, 256], strides = [1, 1]} : vector<16x256xf32> to vector<1x256xf32>
    %57 = vector.extract_strided_slice %50 {offsets = [15, 0], sizes = [1, 256], strides = [1, 1]} : vector<16x256xf32> to vector<1x256xf32>
    %58 = tpu.concatenate %56, %57 in 0 : vector<1x256xf32>, vector<1x256xf32> -> vector<2x256xf32>
    %59 = arith.addf %55, %58 : vector<2x256xf32>
    %60 = vector.extract_strided_slice %59 {offsets = [0, 0], sizes = [2, 192], strides = [1, 1]} : vector<2x256xf32> to vector<2x192xf32>
    %61 = arith.negf %60 : vector<2x192xf32>
    %62 = math.exp %61 : vector<2x192xf32>
    %cst_30 = arith.constant 1.000000e+00 : f32
    %63 = vector.broadcast %cst_30 : f32 to vector<2x192xf32>
    %64 = arith.addf %63, %62 : vector<2x192xf32>
    %65 = arith.divf %63, %64 : vector<2x192xf32>
    %66 = vector.extract_strided_slice %59 {offsets = [0, 192], sizes = [2, 64], strides = [1, 1]} : vector<2x256xf32> to vector<2x64xf32>
    %67 = math.tanh %66 : vector<2x64xf32>
    %68 = vector.extract_strided_slice %65 {offsets = [0, 64], sizes = [2, 64], strides = [1, 1]} : vector<2x192xf32> to vector<2x64xf32>
    %69 = arith.mulf %68, %52 : vector<2x64xf32>
    %70 = vector.extract_strided_slice %65 {offsets = [0, 0], sizes = [2, 64], strides = [1, 1]} : vector<2x192xf32> to vector<2x64xf32>
    %71 = arith.mulf %70, %67 : vector<2x64xf32>
    %72 = arith.addf %69, %71 : vector<2x64xf32>
    %73 = vector.extract_strided_slice %65 {offsets = [0, 128], sizes = [2, 64], strides = [1, 1]} : vector<2x192xf32> to vector<2x64xf32>
    %74 = math.tanh %72 : vector<2x64xf32>
    %75 = arith.mulf %73, %74 : vector<2x64xf32>
    %76 = vector.extract_strided_slice %75 {offsets = [0, 0], sizes = [2, 32], strides = [1, 1]} : vector<2x64xf32> to vector<2x32xf32>
    %77 = vector.extract_strided_slice %75 {offsets = [0, 32], sizes = [2, 32], strides = [1, 1]} : vector<2x64xf32> to vector<2x32xf32>
    %78 = vector.extract_strided_slice %48 {offsets = [1, 0], sizes = [1, 256], strides = [1, 1]} : vector<16x256xf32> to vector<1x256xf32>
    %79 = vector.extract_strided_slice %48 {offsets = [9, 0], sizes = [1, 256], strides = [1, 1]} : vector<16x256xf32> to vector<1x256xf32>
    %80 = tpu.concatenate %78, %79 in 0 : vector<1x256xf32>, vector<1x256xf32> -> vector<2x256xf32>
    %81 = vector.extract_strided_slice %50 {offsets = [6, 0], sizes = [1, 256], strides = [1, 1]} : vector<16x256xf32> to vector<1x256xf32>
    %82 = vector.extract_strided_slice %50 {offsets = [14, 0], sizes = [1, 256], strides = [1, 1]} : vector<16x256xf32> to vector<1x256xf32>
    %83 = tpu.concatenate %81, %82 in 0 : vector<1x256xf32>, vector<1x256xf32> -> vector<2x256xf32>
    %84 = arith.addf %80, %83 : vector<2x256xf32>
    %cst_31 = arith.constant dense<0.000000e+00> : vector<2x256xf32>
    %85 = tpu.matmul %75, %51, %cst_31 {dimension_numbers = #tpu.dot_dimension_numbers<[1], [0], [0], [1], [0, 0, 1, 1], [], []>} : vector<2x64xf32>, vector<64x256xf32>, vector<2x256xf32> -> vector<2x256xf32>
    %86 = arith.addf %84, %85 : vector<2x256xf32>
    %87 = vector.extract_strided_slice %86 {offsets = [0, 0], sizes = [2, 192], strides = [1, 1]} : vector<2x256xf32> to vector<2x192xf32>
    %88 = arith.negf %87 : vector<2x192xf32>
    %89 = math.exp %88 : vector<2x192xf32>
    %cst_32 = arith.constant 1.000000e+00 : f32
    %90 = vector.broadcast %cst_32 : f32 to vector<2x192xf32>
    %91 = arith.addf %90, %89 : vector<2x192xf32>
    %92 = arith.divf %90, %91 : vector<2x192xf32>
    %93 = vector.extract_strided_slice %86 {offsets = [0, 192], sizes = [2, 64], strides = [1, 1]} : vector<2x256xf32> to vector<2x64xf32>
    %94 = math.tanh %93 : vector<2x64xf32>
    %95 = vector.extract_strided_slice %92 {offsets = [0, 64], sizes = [2, 64], strides = [1, 1]} : vector<2x192xf32> to vector<2x64xf32>
    %96 = arith.mulf %95, %72 : vector<2x64xf32>
    %97 = vector.extract_strided_slice %92 {offsets = [0, 0], sizes = [2, 64], strides = [1, 1]} : vector<2x192xf32> to vector<2x64xf32>
    %98 = arith.mulf %97, %94 : vector<2x64xf32>
    %99 = arith.addf %96, %98 : vector<2x64xf32>
    %100 = vector.extract_strided_slice %92 {offsets = [0, 128], sizes = [2, 64], strides = [1, 1]} : vector<2x192xf32> to vector<2x64xf32>
    %101 = math.tanh %99 : vector<2x64xf32>
    %102 = arith.mulf %100, %101 : vector<2x64xf32>
    %103 = vector.extract_strided_slice %102 {offsets = [0, 0], sizes = [2, 32], strides = [1, 1]} : vector<2x64xf32> to vector<2x32xf32>
    %104 = vector.extract_strided_slice %102 {offsets = [0, 32], sizes = [2, 32], strides = [1, 1]} : vector<2x64xf32> to vector<2x32xf32>
    %105 = vector.extract_strided_slice %48 {offsets = [2, 0], sizes = [1, 256], strides = [1, 1]} : vector<16x256xf32> to vector<1x256xf32>
    %106 = vector.extract_strided_slice %48 {offsets = [10, 0], sizes = [1, 256], strides = [1, 1]} : vector<16x256xf32> to vector<1x256xf32>
    %107 = tpu.concatenate %105, %106 in 0 : vector<1x256xf32>, vector<1x256xf32> -> vector<2x256xf32>
    %108 = vector.extract_strided_slice %50 {offsets = [5, 0], sizes = [1, 256], strides = [1, 1]} : vector<16x256xf32> to vector<1x256xf32>
    %109 = vector.extract_strided_slice %50 {offsets = [13, 0], sizes = [1, 256], strides = [1, 1]} : vector<16x256xf32> to vector<1x256xf32>
    %110 = tpu.concatenate %108, %109 in 0 : vector<1x256xf32>, vector<1x256xf32> -> vector<2x256xf32>
    %111 = arith.addf %107, %110 : vector<2x256xf32>
    %cst_33 = arith.constant dense<0.000000e+00> : vector<2x256xf32>
    %112 = tpu.matmul %102, %51, %cst_33 {dimension_numbers = #tpu.dot_dimension_numbers<[1], [0], [0], [1], [0, 0, 1, 1], [], []>} : vector<2x64xf32>, vector<64x256xf32>, vector<2x256xf32> -> vector<2x256xf32>
    %113 = arith.addf %111, %112 : vector<2x256xf32>
    %114 = vector.extract_strided_slice %113 {offsets = [0, 0], sizes = [2, 192], strides = [1, 1]} : vector<2x256xf32> to vector<2x192xf32>
    %115 = arith.negf %114 : vector<2x192xf32>
    %116 = math.exp %115 : vector<2x192xf32>
    %cst_34 = arith.constant 1.000000e+00 : f32
    %117 = vector.broadcast %cst_34 : f32 to vector<2x192xf32>
    %118 = arith.addf %117, %116 : vector<2x192xf32>
    %119 = arith.divf %117, %118 : vector<2x192xf32>
    %120 = vector.extract_strided_slice %113 {offsets = [0, 192], sizes = [2, 64], strides = [1, 1]} : vector<2x256xf32> to vector<2x64xf32>
    %121 = math.tanh %120 : vector<2x64xf32>
    %122 = vector.extract_strided_slice %119 {offsets = [0, 64], sizes = [2, 64], strides = [1, 1]} : vector<2x192xf32> to vector<2x64xf32>
    %123 = arith.mulf %122, %99 : vector<2x64xf32>
    %124 = vector.extract_strided_slice %119 {offsets = [0, 0], sizes = [2, 64], strides = [1, 1]} : vector<2x192xf32> to vector<2x64xf32>
    %125 = arith.mulf %124, %121 : vector<2x64xf32>
    %126 = arith.addf %123, %125 : vector<2x64xf32>
    %127 = vector.extract_strided_slice %119 {offsets = [0, 128], sizes = [2, 64], strides = [1, 1]} : vector<2x192xf32> to vector<2x64xf32>
    %128 = math.tanh %126 : vector<2x64xf32>
    %129 = arith.mulf %127, %128 : vector<2x64xf32>
    %130 = vector.extract_strided_slice %129 {offsets = [0, 0], sizes = [2, 32], strides = [1, 1]} : vector<2x64xf32> to vector<2x32xf32>
    %131 = vector.extract_strided_slice %129 {offsets = [0, 32], sizes = [2, 32], strides = [1, 1]} : vector<2x64xf32> to vector<2x32xf32>
    %132 = vector.extract_strided_slice %48 {offsets = [3, 0], sizes = [1, 256], strides = [1, 1]} : vector<16x256xf32> to vector<1x256xf32>
    %133 = vector.extract_strided_slice %48 {offsets = [11, 0], sizes = [1, 256], strides = [1, 1]} : vector<16x256xf32> to vector<1x256xf32>
    %134 = tpu.concatenate %132, %133 in 0 : vector<1x256xf32>, vector<1x256xf32> -> vector<2x256xf32>
    %135 = vector.extract_strided_slice %50 {offsets = [4, 0], sizes = [1, 256], strides = [1, 1]} : vector<16x256xf32> to vector<1x256xf32>
    %136 = vector.extract_strided_slice %50 {offsets = [12, 0], sizes = [1, 256], strides = [1, 1]} : vector<16x256xf32> to vector<1x256xf32>
    %137 = tpu.concatenate %135, %136 in 0 : vector<1x256xf32>, vector<1x256xf32> -> vector<2x256xf32>
    %138 = arith.addf %134, %137 : vector<2x256xf32>
    %cst_35 = arith.constant dense<0.000000e+00> : vector<2x256xf32>
    %139 = tpu.matmul %129, %51, %cst_35 {dimension_numbers = #tpu.dot_dimension_numbers<[1], [0], [0], [1], [0, 0, 1, 1], [], []>} : vector<2x64xf32>, vector<64x256xf32>, vector<2x256xf32> -> vector<2x256xf32>
    %140 = arith.addf %138, %139 : vector<2x256xf32>
    %141 = vector.extract_strided_slice %140 {offsets = [0, 0], sizes = [2, 192], strides = [1, 1]} : vector<2x256xf32> to vector<2x192xf32>
    %142 = arith.negf %141 : vector<2x192xf32>
    %143 = math.exp %142 : vector<2x192xf32>
    %cst_36 = arith.constant 1.000000e+00 : f32
    %144 = vector.broadcast %cst_36 : f32 to vector<2x192xf32>
    %145 = arith.addf %144, %143 : vector<2x192xf32>
    %146 = arith.divf %144, %145 : vector<2x192xf32>
    %147 = vector.extract_strided_slice %140 {offsets = [0, 192], sizes = [2, 64], strides = [1, 1]} : vector<2x256xf32> to vector<2x64xf32>
    %148 = math.tanh %147 : vector<2x64xf32>
    %149 = vector.extract_strided_slice %146 {offsets = [0, 64], sizes = [2, 64], strides = [1, 1]} : vector<2x192xf32> to vector<2x64xf32>
    %150 = arith.mulf %149, %126 : vector<2x64xf32>
    %151 = vector.extract_strided_slice %146 {offsets = [0, 0], sizes = [2, 64], strides = [1, 1]} : vector<2x192xf32> to vector<2x64xf32>
    %152 = arith.mulf %151, %148 : vector<2x64xf32>
    %153 = arith.addf %150, %152 : vector<2x64xf32>
    %154 = vector.extract_strided_slice %146 {offsets = [0, 128], sizes = [2, 64], strides = [1, 1]} : vector<2x192xf32> to vector<2x64xf32>
    %155 = math.tanh %153 : vector<2x64xf32>
    %156 = arith.mulf %154, %155 : vector<2x64xf32>
    %157 = vector.extract_strided_slice %156 {offsets = [0, 0], sizes = [2, 32], strides = [1, 1]} : vector<2x64xf32> to vector<2x32xf32>
    %158 = vector.extract_strided_slice %156 {offsets = [0, 32], sizes = [2, 32], strides = [1, 1]} : vector<2x64xf32> to vector<2x32xf32>
    %159 = vector.extract_strided_slice %48 {offsets = [4, 0], sizes = [1, 256], strides = [1, 1]} : vector<16x256xf32> to vector<1x256xf32>
    %160 = vector.extract_strided_slice %48 {offsets = [12, 0], sizes = [1, 256], strides = [1, 1]} : vector<16x256xf32> to vector<1x256xf32>
    %161 = tpu.concatenate %159, %160 in 0 : vector<1x256xf32>, vector<1x256xf32> -> vector<2x256xf32>
    %162 = vector.extract_strided_slice %50 {offsets = [3, 0], sizes = [1, 256], strides = [1, 1]} : vector<16x256xf32> to vector<1x256xf32>
    %163 = vector.extract_strided_slice %50 {offsets = [11, 0], sizes = [1, 256], strides = [1, 1]} : vector<16x256xf32> to vector<1x256xf32>
    %164 = tpu.concatenate %162, %163 in 0 : vector<1x256xf32>, vector<1x256xf32> -> vector<2x256xf32>
    %165 = arith.addf %161, %164 : vector<2x256xf32>
    %cst_37 = arith.constant dense<0.000000e+00> : vector<2x256xf32>
    %166 = tpu.matmul %156, %51, %cst_37 {dimension_numbers = #tpu.dot_dimension_numbers<[1], [0], [0], [1], [0, 0, 1, 1], [], []>} : vector<2x64xf32>, vector<64x256xf32>, vector<2x256xf32> -> vector<2x256xf32>
    %167 = arith.addf %165, %166 : vector<2x256xf32>
    %168 = vector.extract_strided_slice %167 {offsets = [0, 0], sizes = [2, 192], strides = [1, 1]} : vector<2x256xf32> to vector<2x192xf32>
    %169 = arith.negf %168 : vector<2x192xf32>
    %170 = math.exp %169 : vector<2x192xf32>
    %cst_38 = arith.constant 1.000000e+00 : f32
    %171 = vector.broadcast %cst_38 : f32 to vector<2x192xf32>
    %172 = arith.addf %171, %170 : vector<2x192xf32>
    %173 = arith.divf %171, %172 : vector<2x192xf32>
    %174 = vector.extract_strided_slice %167 {offsets = [0, 192], sizes = [2, 64], strides = [1, 1]} : vector<2x256xf32> to vector<2x64xf32>
    %175 = math.tanh %174 : vector<2x64xf32>
    %176 = vector.extract_strided_slice %173 {offsets = [0, 64], sizes = [2, 64], strides = [1, 1]} : vector<2x192xf32> to vector<2x64xf32>
    %177 = arith.mulf %176, %153 : vector<2x64xf32>
    %178 = vector.extract_strided_slice %173 {offsets = [0, 0], sizes = [2, 64], strides = [1, 1]} : vector<2x192xf32> to vector<2x64xf32>
    %179 = arith.mulf %178, %175 : vector<2x64xf32>
    %180 = arith.addf %177, %179 : vector<2x64xf32>
    %181 = vector.extract_strided_slice %173 {offsets = [0, 128], sizes = [2, 64], strides = [1, 1]} : vector<2x192xf32> to vector<2x64xf32>
    %182 = math.tanh %180 : vector<2x64xf32>
    %183 = arith.mulf %181, %182 : vector<2x64xf32>
    %184 = vector.extract_strided_slice %183 {offsets = [0, 0], sizes = [2, 32], strides = [1, 1]} : vector<2x64xf32> to vector<2x32xf32>
    %185 = vector.extract_strided_slice %183 {offsets = [0, 32], sizes = [2, 32], strides = [1, 1]} : vector<2x64xf32> to vector<2x32xf32>
    %186 = vector.extract_strided_slice %48 {offsets = [5, 0], sizes = [1, 256], strides = [1, 1]} : vector<16x256xf32> to vector<1x256xf32>
    %187 = vector.extract_strided_slice %48 {offsets = [13, 0], sizes = [1, 256], strides = [1, 1]} : vector<16x256xf32> to vector<1x256xf32>
    %188 = tpu.concatenate %186, %187 in 0 : vector<1x256xf32>, vector<1x256xf32> -> vector<2x256xf32>
    %189 = vector.extract_strided_slice %50 {offsets = [2, 0], sizes = [1, 256], strides = [1, 1]} : vector<16x256xf32> to vector<1x256xf32>
    %190 = vector.extract_strided_slice %50 {offsets = [10, 0], sizes = [1, 256], strides = [1, 1]} : vector<16x256xf32> to vector<1x256xf32>
    %191 = tpu.concatenate %189, %190 in 0 : vector<1x256xf32>, vector<1x256xf32> -> vector<2x256xf32>
    %192 = arith.addf %188, %191 : vector<2x256xf32>
    %cst_39 = arith.constant dense<0.000000e+00> : vector<2x256xf32>
    %193 = tpu.matmul %183, %51, %cst_39 {dimension_numbers = #tpu.dot_dimension_numbers<[1], [0], [0], [1], [0, 0, 1, 1], [], []>} : vector<2x64xf32>, vector<64x256xf32>, vector<2x256xf32> -> vector<2x256xf32>
    %194 = arith.addf %192, %193 : vector<2x256xf32>
    %195 = vector.extract_strided_slice %194 {offsets = [0, 0], sizes = [2, 192], strides = [1, 1]} : vector<2x256xf32> to vector<2x192xf32>
    %196 = arith.negf %195 : vector<2x192xf32>
    %197 = math.exp %196 : vector<2x192xf32>
    %cst_40 = arith.constant 1.000000e+00 : f32
    %198 = vector.broadcast %cst_40 : f32 to vector<2x192xf32>
    %199 = arith.addf %198, %197 : vector<2x192xf32>
    %200 = arith.divf %198, %199 : vector<2x192xf32>
    %201 = vector.extract_strided_slice %194 {offsets = [0, 192], sizes = [2, 64], strides = [1, 1]} : vector<2x256xf32> to vector<2x64xf32>
    %202 = math.tanh %201 : vector<2x64xf32>
    %203 = vector.extract_strided_slice %200 {offsets = [0, 64], sizes = [2, 64], strides = [1, 1]} : vector<2x192xf32> to vector<2x64xf32>
    %204 = arith.mulf %203, %180 : vector<2x64xf32>
    %205 = vector.extract_strided_slice %200 {offsets = [0, 0], sizes = [2, 64], strides = [1, 1]} : vector<2x192xf32> to vector<2x64xf32>
    %206 = arith.mulf %205, %202 : vector<2x64xf32>
    %207 = arith.addf %204, %206 : vector<2x64xf32>
    %208 = vector.extract_strided_slice %200 {offsets = [0, 128], sizes = [2, 64], strides = [1, 1]} : vector<2x192xf32> to vector<2x64xf32>
    %209 = math.tanh %207 : vector<2x64xf32>
    %210 = arith.mulf %208, %209 : vector<2x64xf32>
    %211 = vector.extract_strided_slice %210 {offsets = [0, 0], sizes = [2, 32], strides = [1, 1]} : vector<2x64xf32> to vector<2x32xf32>
    %212 = vector.extract_strided_slice %210 {offsets = [0, 32], sizes = [2, 32], strides = [1, 1]} : vector<2x64xf32> to vector<2x32xf32>
    %213 = vector.extract_strided_slice %48 {offsets = [6, 0], sizes = [1, 256], strides = [1, 1]} : vector<16x256xf32> to vector<1x256xf32>
    %214 = vector.extract_strided_slice %48 {offsets = [14, 0], sizes = [1, 256], strides = [1, 1]} : vector<16x256xf32> to vector<1x256xf32>
    %215 = tpu.concatenate %213, %214 in 0 : vector<1x256xf32>, vector<1x256xf32> -> vector<2x256xf32>
    %216 = vector.extract_strided_slice %50 {offsets = [1, 0], sizes = [1, 256], strides = [1, 1]} : vector<16x256xf32> to vector<1x256xf32>
    %217 = vector.extract_strided_slice %50 {offsets = [9, 0], sizes = [1, 256], strides = [1, 1]} : vector<16x256xf32> to vector<1x256xf32>
    %218 = tpu.concatenate %216, %217 in 0 : vector<1x256xf32>, vector<1x256xf32> -> vector<2x256xf32>
    %219 = arith.addf %215, %218 : vector<2x256xf32>
    %cst_41 = arith.constant dense<0.000000e+00> : vector<2x256xf32>
    %220 = tpu.matmul %210, %51, %cst_41 {dimension_numbers = #tpu.dot_dimension_numbers<[1], [0], [0], [1], [0, 0, 1, 1], [], []>} : vector<2x64xf32>, vector<64x256xf32>, vector<2x256xf32> -> vector<2x256xf32>
    %221 = arith.addf %219, %220 : vector<2x256xf32>
    %222 = vector.extract_strided_slice %221 {offsets = [0, 0], sizes = [2, 192], strides = [1, 1]} : vector<2x256xf32> to vector<2x192xf32>
    %223 = arith.negf %222 : vector<2x192xf32>
    %224 = math.exp %223 : vector<2x192xf32>
    %cst_42 = arith.constant 1.000000e+00 : f32
    %225 = vector.broadcast %cst_42 : f32 to vector<2x192xf32>
    %226 = arith.addf %225, %224 : vector<2x192xf32>
    %227 = arith.divf %225, %226 : vector<2x192xf32>
    %228 = vector.extract_strided_slice %221 {offsets = [0, 192], sizes = [2, 64], strides = [1, 1]} : vector<2x256xf32> to vector<2x64xf32>
    %229 = math.tanh %228 : vector<2x64xf32>
    %230 = vector.extract_strided_slice %227 {offsets = [0, 64], sizes = [2, 64], strides = [1, 1]} : vector<2x192xf32> to vector<2x64xf32>
    %231 = arith.mulf %230, %207 : vector<2x64xf32>
    %232 = vector.extract_strided_slice %227 {offsets = [0, 0], sizes = [2, 64], strides = [1, 1]} : vector<2x192xf32> to vector<2x64xf32>
    %233 = arith.mulf %232, %229 : vector<2x64xf32>
    %234 = arith.addf %231, %233 : vector<2x64xf32>
    %235 = vector.extract_strided_slice %227 {offsets = [0, 128], sizes = [2, 64], strides = [1, 1]} : vector<2x192xf32> to vector<2x64xf32>
    %236 = math.tanh %234 : vector<2x64xf32>
    %237 = arith.mulf %235, %236 : vector<2x64xf32>
    %238 = vector.extract_strided_slice %237 {offsets = [0, 0], sizes = [2, 32], strides = [1, 1]} : vector<2x64xf32> to vector<2x32xf32>
    %239 = vector.extract_strided_slice %237 {offsets = [0, 32], sizes = [2, 32], strides = [1, 1]} : vector<2x64xf32> to vector<2x32xf32>
    %240 = vector.extract_strided_slice %48 {offsets = [7, 0], sizes = [1, 256], strides = [1, 1]} : vector<16x256xf32> to vector<1x256xf32>
    %241 = vector.extract_strided_slice %48 {offsets = [15, 0], sizes = [1, 256], strides = [1, 1]} : vector<16x256xf32> to vector<1x256xf32>
    %242 = tpu.concatenate %240, %241 in 0 : vector<1x256xf32>, vector<1x256xf32> -> vector<2x256xf32>
    %243 = vector.extract_strided_slice %50 {offsets = [0, 0], sizes = [1, 256], strides = [1, 1]} : vector<16x256xf32> to vector<1x256xf32>
    %244 = vector.extract_strided_slice %50 {offsets = [8, 0], sizes = [1, 256], strides = [1, 1]} : vector<16x256xf32> to vector<1x256xf32>
    %245 = tpu.concatenate %243, %244 in 0 : vector<1x256xf32>, vector<1x256xf32> -> vector<2x256xf32>
    %246 = arith.addf %242, %245 : vector<2x256xf32>
    %cst_43 = arith.constant dense<0.000000e+00> : vector<2x256xf32>
    %247 = tpu.matmul %237, %51, %cst_43 {dimension_numbers = #tpu.dot_dimension_numbers<[1], [0], [0], [1], [0, 0, 1, 1], [], []>} : vector<2x64xf32>, vector<64x256xf32>, vector<2x256xf32> -> vector<2x256xf32>
    %248 = arith.addf %246, %247 : vector<2x256xf32>
    %249 = vector.extract_strided_slice %248 {offsets = [0, 0], sizes = [2, 192], strides = [1, 1]} : vector<2x256xf32> to vector<2x192xf32>
    %250 = arith.negf %249 : vector<2x192xf32>
    %251 = math.exp %250 : vector<2x192xf32>
    %cst_44 = arith.constant 1.000000e+00 : f32
    %252 = vector.broadcast %cst_44 : f32 to vector<2x192xf32>
    %253 = arith.addf %252, %251 : vector<2x192xf32>
    %254 = arith.divf %252, %253 : vector<2x192xf32>
    %255 = vector.extract_strided_slice %248 {offsets = [0, 192], sizes = [2, 64], strides = [1, 1]} : vector<2x256xf32> to vector<2x64xf32>
    %256 = math.tanh %255 : vector<2x64xf32>
    %257 = vector.extract_strided_slice %254 {offsets = [0, 64], sizes = [2, 64], strides = [1, 1]} : vector<2x192xf32> to vector<2x64xf32>
    %258 = arith.mulf %257, %234 : vector<2x64xf32>
    %259 = vector.extract_strided_slice %254 {offsets = [0, 0], sizes = [2, 64], strides = [1, 1]} : vector<2x192xf32> to vector<2x64xf32>
    %260 = arith.mulf %259, %256 : vector<2x64xf32>
    %261 = arith.addf %258, %260 : vector<2x64xf32>
    %262 = vector.extract_strided_slice %254 {offsets = [0, 128], sizes = [2, 64], strides = [1, 1]} : vector<2x192xf32> to vector<2x64xf32>
    %263 = math.tanh %261 : vector<2x64xf32>
    %264 = arith.mulf %262, %263 : vector<2x64xf32>
    %265 = vector.extract_strided_slice %264 {offsets = [0, 0], sizes = [2, 32], strides = [1, 1]} : vector<2x64xf32> to vector<2x32xf32>
    %266 = vector.extract_strided_slice %264 {offsets = [0, 32], sizes = [2, 32], strides = [1, 1]} : vector<2x64xf32> to vector<2x32xf32>
    %267 = tpu.concatenate %76, %266 in 1 : vector<2x32xf32>, vector<2x32xf32> -> vector<2x64xf32>
    %268 = tpu.concatenate %103, %239 in 1 : vector<2x32xf32>, vector<2x32xf32> -> vector<2x64xf32>
    %269 = tpu.concatenate %130, %212 in 1 : vector<2x32xf32>, vector<2x32xf32> -> vector<2x64xf32>
    %270 = tpu.concatenate %157, %185 in 1 : vector<2x32xf32>, vector<2x32xf32> -> vector<2x64xf32>
    %271 = tpu.concatenate %184, %158 in 1 : vector<2x32xf32>, vector<2x32xf32> -> vector<2x64xf32>
    %272 = tpu.concatenate %211, %131 in 1 : vector<2x32xf32>, vector<2x32xf32> -> vector<2x64xf32>
    %273 = tpu.concatenate %238, %104 in 1 : vector<2x32xf32>, vector<2x32xf32> -> vector<2x64xf32>
    %274 = tpu.concatenate %265, %77 in 1 : vector<2x32xf32>, vector<2x32xf32> -> vector<2x64xf32>
    %275 = tpu.concatenate %267, %268, %269, %270, %271, %272, %273, %274 in 0 : vector<2x64xf32>, vector<2x64xf32>, vector<2x64xf32>, vector<2x64xf32>, vector<2x64xf32>, vector<2x64xf32>, vector<2x64xf32>, vector<2x64xf32> -> vector<16x64xf32>
    %c0_45 = arith.constant 0 : index
    %c0_46 = arith.constant 0 : index
    %276 = vector.load %arg10[%c0_45, %c0_46] : memref<64x1xf32, #tpu.memory_space<vmem>>, vector<64x1xf32>
    %cst_47 = arith.constant dense<0.000000e+00> : vector<16x1xf32>
    %277 = tpu.matmul %275, %276, %cst_47 {dimension_numbers = #tpu.dot_dimension_numbers<[1], [0], [0], [1], [0, 0, 1, 1], [], []>} : vector<16x64xf32>, vector<64x1xf32>, vector<16x1xf32> -> vector<16x1xf32>
    %278 = tpu.iota {dimensions = array<i32: 0>} : vector<16x1xi32>
    %c2_i32 = arith.constant 2 : i32
    %c0_i32_48 = arith.constant 0 : i32
    %279 = arith.cmpi eq, %c2_i32, %c0_i32_48 : i32
    %c1_i32_49 = arith.constant 1 : i32
    %280 = arith.select %279, %c1_i32_49, %c2_i32 : i32
    %281 = vector.broadcast %280 : i32 to vector<16x1xi32>
    %282 = arith.remsi %278, %281 : vector<16x1xi32>
    %c0_i32_50 = arith.constant 0 : i32
    %283 = vector.broadcast %c0_i32_50 : i32 to vector<16x1xi32>
    %284 = arith.cmpi ne, %282, %283 : vector<16x1xi32>
    %c0_i32_51 = arith.constant 0 : i32
    %285 = vector.broadcast %c0_i32_51 : i32 to vector<16x1xi32>
    %286 = arith.cmpi slt, %282, %285 : vector<16x1xi32>
    %c0_i32_52 = arith.constant 0 : i32
    %287 = arith.cmpi slt, %280, %c0_i32_52 : i32
    %288 = vector.broadcast %287 : i1 to vector<16x1xi1>
    %289 = vector.broadcast %288 : vector<16x1xi1> to vector<16x1xi1>
    %290 = arith.xori %286, %289 : vector<16x1xi1>
    %291 = arith.andi %290, %284 : vector<16x1xi1>
    %292 = vector.broadcast %280 : i32 to vector<16x1xi32>
    %293 = arith.addi %282, %292 : vector<16x1xi32>
    %294 = arith.select %291, %293, %282 : vector<16x1xi1>, vector<16x1xi32>
    %c0_i32_53 = arith.constant 0 : i32
    %295 = vector.broadcast %c0_i32_53 : i32 to vector<16x1xi32>
    %296 = arith.cmpi eq, %294, %295 : vector<16x1xi32>
    %cst_54 = arith.constant 0xFF800000 : f32
    %297 = vector.broadcast %cst_54 : f32 to vector<16x1xf32>
    %298 = arith.select %296, %277, %297 : vector<16x1xi1>, vector<16x1xf32>
    %299 = vector.shape_cast %298 : vector<16x1xf32> to vector<1x16x1xf32>
    %cst_55 = arith.constant dense<0xFF800000> : vector<1xf32>
    %300 = vector.multi_reduction <maximumf>, %299, %cst_55 [1, 2] : vector<1x16x1xf32> to vector<1xf32>
    %301 = vector.shape_cast %300 : vector<1xf32> to vector<1x1x1xf32>
    %302 = vector.extract %301[0, 0, 0] : f32 from vector<1x1x1xf32>
    %303 = vector.broadcast %302 : f32 to vector<1x1xf32>
    %304 = vector.broadcast %303 : vector<1x1xf32> to vector<16x1xf32>
    %305 = arith.subf %298, %304 : vector<16x1xf32>
    %306 = math.exp %305 : vector<16x1xf32>
    %307 = vector.shape_cast %306 : vector<16x1xf32> to vector<1x16x1xf32>
    %cst_56 = arith.constant dense<0.000000e+00> : vector<1xf32>
    %308 = vector.multi_reduction <add>, %307, %cst_56 [1, 2] : vector<1x16x1xf32> to vector<1xf32>
    %309 = vector.shape_cast %308 : vector<1xf32> to vector<1x1x1xf32>
    %310 = vector.extract %309[0, 0, 0] : f32 from vector<1x1x1xf32>
    %311 = vector.broadcast %310 : f32 to vector<1x1xf32>
    %312 = vector.broadcast %311 : vector<1x1xf32> to vector<16x1xf32>
    %313 = arith.divf %306, %312 : vector<16x1xf32>
    %314 = vector.broadcast %313 : vector<16x1xf32> to vector<16x64xf32>
    %315 = arith.mulf %314, %275 : vector<16x64xf32>
    %cst_57 = arith.constant dense<0.000000e+00> : vector<64xf32>
    %316 = vector.multi_reduction <add>, %315, %cst_57 [0] : vector<16x64xf32> to vector<64xf32>
    %317 = vector.shape_cast %316 : vector<64xf32> to vector<1x64xf32>
    %c1_i32_58 = arith.constant 1 : i32
    %318 = vector.broadcast %c1_i32_58 : i32 to vector<16x1xi32>
    %319 = arith.cmpi eq, %294, %318 : vector<16x1xi32>
    %cst_59 = arith.constant 0xFF800000 : f32
    %320 = vector.broadcast %cst_59 : f32 to vector<16x1xf32>
    %321 = arith.select %319, %277, %320 : vector<16x1xi1>, vector<16x1xf32>
    %322 = vector.shape_cast %321 : vector<16x1xf32> to vector<1x16x1xf32>
    %cst_60 = arith.constant dense<0xFF800000> : vector<1xf32>
    %323 = vector.multi_reduction <maximumf>, %322, %cst_60 [1, 2] : vector<1x16x1xf32> to vector<1xf32>
    %324 = vector.shape_cast %323 : vector<1xf32> to vector<1x1x1xf32>
    %325 = vector.extract %324[0, 0, 0] : f32 from vector<1x1x1xf32>
    %326 = vector.broadcast %325 : f32 to vector<1x1xf32>
    %327 = vector.broadcast %326 : vector<1x1xf32> to vector<16x1xf32>
    %328 = arith.subf %321, %327 : vector<16x1xf32>
    %329 = math.exp %328 : vector<16x1xf32>
    %330 = vector.shape_cast %329 : vector<16x1xf32> to vector<1x16x1xf32>
    %cst_61 = arith.constant dense<0.000000e+00> : vector<1xf32>
    %331 = vector.multi_reduction <add>, %330, %cst_61 [1, 2] : vector<1x16x1xf32> to vector<1xf32>
    %332 = vector.shape_cast %331 : vector<1xf32> to vector<1x1x1xf32>
    %333 = vector.extract %332[0, 0, 0] : f32 from vector<1x1x1xf32>
    %334 = vector.broadcast %333 : f32 to vector<1x1xf32>
    %335 = vector.broadcast %334 : vector<1x1xf32> to vector<16x1xf32>
    %336 = arith.divf %329, %335 : vector<16x1xf32>
    %337 = vector.broadcast %336 : vector<16x1xf32> to vector<16x64xf32>
    %338 = arith.mulf %337, %275 : vector<16x64xf32>
    %cst_62 = arith.constant dense<0.000000e+00> : vector<64xf32>
    %339 = vector.multi_reduction <add>, %338, %cst_62 [0] : vector<16x64xf32> to vector<64xf32>
    %340 = vector.shape_cast %339 : vector<64xf32> to vector<1x64xf32>
    %341 = tpu.concatenate %317, %340 in 0 : vector<1x64xf32>, vector<1x64xf32> -> vector<2x64xf32>
    %c0_63 = arith.constant 0 : index
    %c0_64 = arith.constant 0 : index
    %342 = vector.load %arg11[%c0_63, %c0_64] : memref<64x6xf32, #tpu.memory_space<vmem>>, vector<64x6xf32>
    %cst_65 = arith.constant dense<0.000000e+00> : vector<2x6xf32>
    %343 = tpu.matmul %341, %342, %cst_65 {dimension_numbers = #tpu.dot_dimension_numbers<[1], [0], [0], [1], [0, 0, 1, 1], [], []>} : vector<2x64xf32>, vector<64x6xf32>, vector<2x6xf32> -> vector<2x6xf32>
    %c0_66 = arith.constant 0 : index
    %c0_67 = arith.constant 0 : index
    %344 = vector.load %arg12[%c0_66, %c0_67] : memref<1x6xf32, #tpu.memory_space<vmem>>, vector<1x6xf32>
    %345 = vector.broadcast %344 : vector<1x6xf32> to vector<2x6xf32>
    %346 = arith.addf %343, %345 : vector<2x6xf32>
    %c0_68 = arith.constant 0 : index
    %c0_69 = arith.constant 0 : index
    %347 = vector.load %arg13[%c0_68, %c0_69] : memref<2x6xf32, #tpu.memory_space<vmem>>, vector<2x6xf32>
    tpu.vector_store %arg13[%c0_68, %c0_69], %346 {strides = array<i32>} : memref<2x6xf32, #tpu.memory_space<vmem>>, vector<2x6xf32>,
    return
  }
  func.func @transform_0(%arg0: i32) -> (i32, i32) {
    %c0_i32 = arith.constant 0 : i32
    %c0_i32_0 = arith.constant 0 : i32
    %c0_i32_1 = arith.constant 0 : i32
    return %c0_i32, %c0_i32_0 : i32, i32
  }
  func.func @transform_1(%arg0: i32) -> (i32, i32) {
    %c0_i32 = arith.constant 0 : i32
    %c0_i32_0 = arith.constant 0 : i32
    %c0_i32_1 = arith.constant 0 : i32
    return %c0_i32, %c0_i32_0 : i32, i32
  }
  func.func @transform_2(%arg0: i32) -> (i32, i32) {
    %c0_i32 = arith.constant 0 : i32
    %c0_i32_0 = arith.constant 0 : i32
    %c0_i32_1 = arith.constant 0 : i32
    return %c0_i32, %c0_i32_0 : i32, i32
  }
  func.func @transform_3(%arg0: i32) -> (i32, i32) {
    %c0_i32 = arith.constant 0 : i32
    %c0_i32_0 = arith.constant 0 : i32
    %c0_i32_1 = arith.constant 0 : i32
    return %c0_i32, %c0_i32_0 : i32, i32
  }
  func.func @transform_4(%arg0: i32) -> (i32, i32) {
    %c0_i32 = arith.constant 0 : i32
    %c0_i32_0 = arith.constant 0 : i32
    %c0_i32_1 = arith.constant 0 : i32
    return %c0_i32, %c0_i32_0 : i32, i32
  }
  func.func @transform_5(%arg0: i32) -> (i32, i32) {
    %c0_i32 = arith.constant 0 : i32
    %c0_i32_0 = arith.constant 0 : i32
    %c0_i32_1 = arith.constant 0 : i32
    return %c0_i32, %c0_i32_0 : i32, i32
  }
  func.func @transform_6(%arg0: i32) -> (i32, i32) {
    %c0_i32 = arith.constant 0 : i32
    %c0_i32_0 = arith.constant 0 : i32
    %c0_i32_1 = arith.constant 0 : i32
    return %c0_i32, %c0_i32_0 : i32, i32
  }
  func.func @transform_7(%arg0: i32) -> (i32, i32) {
    %c0_i32 = arith.constant 0 : i32
    %c0_i32_0 = arith.constant 0 : i32
    %c0_i32_1 = arith.constant 0 : i32
    return %c0_i32, %c0_i32_0 : i32, i32
  }
  func.func @transform_8(%arg0: i32) -> (i32, i32) {
    %c0_i32 = arith.constant 0 : i32
    %c0_i32_0 = arith.constant 0 : i32
    %c0_i32_1 = arith.constant 0 : i32
    return %c0_i32, %c0_i32_0 : i32, i32
  }
  func.func @transform_9(%arg0: i32) -> (i32, i32) {
    %c0_i32 = arith.constant 0 : i32
    %c0_i32_0 = arith.constant 0 : i32
    %c0_i32_1 = arith.constant 0 : i32
    return %c0_i32, %c0_i32_0 : i32, i32
  }
  func.func @transform_10(%arg0: i32) -> (i32, i32) {
    %c0_i32 = arith.constant 0 : i32
    %c0_i32_0 = arith.constant 0 : i32
    %c0_i32_1 = arith.constant 0 : i32
    return %c0_i32, %c0_i32_0 : i32, i32
  }
  func.func @transform_11(%arg0: i32) -> (i32, i32) {
    %c0_i32 = arith.constant 0 : i32
    %c0_i32_0 = arith.constant 0 : i32
    %c0_i32_1 = arith.constant 0 : i32
    return %c0_i32, %c0_i32_0 : i32, i32
  }
  func.func @transform_12(%arg0: i32) -> (i32, i32) {
    %c0_i32 = arith.constant 0 : i32
    %c0_i32_0 = arith.constant 0 : i32
    %c0_i32_1 = arith.constant 0 : i32
    return %c0_i32, %c0_i32_0 : i32, i32
  }
}

</mosaic_0001>

<llo_original>
// kernel: axial_cls_forward.1
$region0: #{axial_cls_forward.1}
  #allocation0 [shape = 'u32[]', space=smem, size = 0x4, offset = 0x4, fixed_abs, tag = 'smem constant byte address 0x4 - core index']
  #allocation1 [shape = 'u32[72,128]{1,0:T(1,128)}', space=vmem, size = 0x9000, scoped, tag = 'internal scratch']
  %s0 = inlined_call_operand.vmem [shape: f32[16,256], index: 0, kind: input, shape index: {}]
  %s1 = inlined_call_operand.vmem [shape: f32[256,32], index: 1, kind: input, shape index: {}]
  %s2 = inlined_call_operand.vmem [shape: f32[256,32], index: 2, kind: input, shape index: {}]
  %s3 = inlined_call_operand.vmem [shape: f32[256,32], index: 3, kind: input, shape index: {}]
  %s4 = inlined_call_operand.vmem [shape: f32[1,32], index: 4, kind: input, shape index: {}]
  %s5 = inlined_call_operand.vmem [shape: f32[32,256], index: 5, kind: input, shape index: {}]
  %s6 = inlined_call_operand.vmem [shape: f32[32,256], index: 6, kind: input, shape index: {}]
  %s7 = inlined_call_operand.vmem [shape: f32[1,256], index: 7, kind: input, shape index: {}]
  %s8 = inlined_call_operand.vmem [shape: f32[64,256], index: 8, kind: input, shape index: {}]
  %s9 = inlined_call_operand.vmem [shape: f32[64,1], index: 9, kind: input, shape index: {}]
  %s10 = inlined_call_operand.vmem [shape: f32[64,6], index: 10, kind: input, shape index: {}]
  %s11 = inlined_call_operand.vmem [shape: f32[1,6], index: 11, kind: input, shape index: {}]
  %s12 = inlined_call_operand.hbm [shape: f32[2,6], index: 12, kind: output, shape index: {}]
  %s13 = sld [smem:[#allocation0]]
  $region58: #{axial_cls_forward.1} parent=0
    _
  %s15 = ssub.s32 1, %s13
  %s16 = scalar_select 0, %s15, %s13
  $region1: #{axial_cls_forward.1} parent=0
    #allocation2 [shape = 'u8[1024]{0}', space=vmem, size = 0x400, scoped, tag = 'output window, operand 0, single buffered']
    #allocation3 [shape = 's32[1]{0}', space=sflag, size = 0x4, scoped, tag = 'scoped memory for axial_cls_forward.1']
    %17 = vsyncpa [#allocation3], 0
    // Predicated region
    $region2: #{axial_cls_forward.1} parent=1 // pred_check
      _
    $region3: #{axial_cls_forward.1} parent=1 // pred_check_branch
      %19 = sbr.rel (0) target = $region5
    $region4: #{axial_cls_forward.1} parent=1 // pred_region
      _
    $region5: #{axial_cls_forward.1} parent=1 // pred_fallthru
      _
    // Predicated region
    $region6: #{axial_cls_forward.1} parent=1 // pred_check
      _
    $region7: #{axial_cls_forward.1} parent=1 // pred_check_branch
      %21 = sbr.rel (0) target = $region9
    $region8: #{axial_cls_forward.1} parent=1 // pred_region
      _
    $region9: #{axial_cls_forward.1} parent=1 // pred_fallthru
      _
    // Predicated region
    $region10: #{axial_cls_forward.1} parent=1 // pred_check
      _
    $region11: #{axial_cls_forward.1} parent=1 // pred_check_branch
      %23 = sbr.rel (0) target = $region13
    $region12: #{axial_cls_forward.1} parent=1 // pred_region
      _
    $region13: #{axial_cls_forward.1} parent=1 // pred_fallthru
      _
    // Predicated region
    $region14: #{axial_cls_forward.1} parent=1 // pred_check
      _
    $region15: #{axial_cls_forward.1} parent=1 // pred_check_branch
      %25 = sbr.rel (0) target = $region17
    $region16: #{axial_cls_forward.1} parent=1 // pred_region
      _
    $region17: #{axial_cls_forward.1} parent=1 // pred_fallthru
      _
    // Predicated region
    $region18: #{axial_cls_forward.1} parent=1 // pred_check
      _
    $region19: #{axial_cls_forward.1} parent=1 // pred_check_branch
      %27 = sbr.rel (0) target = $region21
    $region20: #{axial_cls_forward.1} parent=1 // pred_region
      _
    $region21: #{axial_cls_forward.1} parent=1 // pred_fallthru
      _
    // Predicated region
    $region22: #{axial_cls_forward.1} parent=1 // pred_check
      _
    $region23: #{axial_cls_forward.1} parent=1 // pred_check_branch
      %29 = sbr.rel (0) target = $region25
    $region24: #{axial_cls_forward.1} parent=1 // pred_region
      _
    $region25: #{axial_cls_forward.1} parent=1 // pred_fallthru
      _
    // Predicated region
    $region26: #{axial_cls_forward.1} parent=1 // pred_check
      _
    $region27: #{axial_cls_forward.1} parent=1 // pred_check_branch
      %31 = sbr.rel (0) target = $region29
    $region28: #{axial_cls_forward.1} parent=1 // pred_region
      _
    $region29: #{axial_cls_forward.1} parent=1 // pred_fallthru
      _
    // Predicated region
    $region30: #{axial_cls_forward.1} parent=1 // pred_check
      _
    $region31: #{axial_cls_forward.1} parent=1 // pred_check_branch
      %33 = sbr.rel (0) target = $region33
    $region32: #{axial_cls_forward.1} parent=1 // pred_region
      _
    $region33: #{axial_cls_forward.1} parent=1 // pred_fallthru
      _
    // Predicated region
    $region34: #{axial_cls_forward.1} parent=1 // pred_check
      _
    $region35: #{axial_cls_forward.1} parent=1 // pred_check_branch
      %35 = sbr.rel (0) target = $region37
    $region36: #{axial_cls_forward.1} parent=1 // pred_region
      _
    $region37: #{axial_cls_forward.1} parent=1 // pred_fallthru
      _
    // Predicated region
    $region38: #{axial_cls_forward.1} parent=1 // pred_check
      _
    $region39: #{axial_cls_forward.1} parent=1 // pred_check_branch
      %37 = sbr.rel (0) target = $region41
    $region40: #{axial_cls_forward.1} parent=1 // pred_region
      _
    $region41: #{axial_cls_forward.1} parent=1 // pred_fallthru
      _
    // Predicated region
    $region42: #{axial_cls_forward.1} parent=1 // pred_check
      _
    $region43: #{axial_cls_forward.1} parent=1 // pred_check_branch
      %39 = sbr.rel (0) target = $region45
    $region44: #{axial_cls_forward.1} parent=1 // pred_region
      _
    $region45: #{axial_cls_forward.1} parent=1 // pred_fallthru
      _
    // Predicated region
    $region46: #{axial_cls_forward.1} parent=1 // pred_check
      _
    $region47: #{axial_cls_forward.1} parent=1 // pred_check_branch
      %41 = sbr.rel (0) target = $region49
    $region48: #{axial_cls_forward.1} parent=1 // pred_region
      _
    $region49: #{axial_cls_forward.1} parent=1 // pred_fallthru
      _
    %v42 = vld [vmem:[%s0] sm:$0xff]
    %v43 = vld [vmem:[%s0 + $0x8] sm:$0xff]
    %v44 = vld [vmem:[%s0 + $0x10] sm:$0xff]
    %v45 = vld [vmem:[%s0 + $0x18] sm:$0xff]
    %v46 = vld [vmem:[%s1] sm:$0xff]
    %v47 = vld [vmem:[%s1 + $0x8] sm:$0xff]
    %v48 = vld [vmem:[%s1 + $0x10] sm:$0xff]
    %v49 = vld [vmem:[%s1 + $0x18] sm:$0xff]
    %v50 = vld [vmem:[%s1 + $0x20] sm:$0xff]
    %v51 = vld [vmem:[%s1 + $0x28] sm:$0xff]
    %v52 = vld [vmem:[%s1 + $0x30] sm:$0xff]
    %v53 = vld [vmem:[%s1 + $0x38] sm:$0xff]
    %v54 = vld [vmem:[%s1 + $0x40] sm:$0xff]
    %v55 = vld [vmem:[%s1 + $0x48] sm:$0xff]
    %v56 = vld [vmem:[%s1 + $0x50] sm:$0xff]
    %v57 = vld [vmem:[%s1 + $0x58] sm:$0xff]
    %v58 = vld [vmem:[%s1 + $0x60] sm:$0xff]
    %v59 = vld [vmem:[%s1 + $0x68] sm:$0xff]
    %v60 = vld [vmem:[%s1 + $0x70] sm:$0xff]
    %v61 = vld [vmem:[%s1 + $0x78] sm:$0xff]
    %v62 = vld [vmem:[%s1 + $0x80] sm:$0xff]
    %v63 = vld [vmem:[%s1 + $0x88] sm:$0xff]
    %v64 = vld [vmem:[%s1 + $0x90] sm:$0xff]
    %v65 = vld [vmem:[%s1 + $0x98] sm:$0xff]
    %v66 = vld [vmem:[%s1 + $0xa0] sm:$0xff]
    %v67 = vld [vmem:[%s1 + $0xa8] sm:$0xff]
    %v68 = vld [vmem:[%s1 + $0xb0] sm:$0xff]
    %v69 = vld [vmem:[%s1 + $0xb8] sm:$0xff]
    %v70 = vld [vmem:[%s1 + $0xc0] sm:$0xff]
    %v71 = vld [vmem:[%s1 + $0xc8] sm:$0xff]
    %v72 = vld [vmem:[%s1 + $0xd0] sm:$0xff]
    %v73 = vld [vmem:[%s1 + $0xd8] sm:$0xff]
    %v74 = vld [vmem:[%s1 + $0xe0] sm:$0xff]
    %v75 = vld [vmem:[%s1 + $0xe8] sm:$0xff]
    %v76 = vld [vmem:[%s1 + $0xf0] sm:$0xff]
    %v77 = vld [vmem:[%s1 + $0xf8] sm:$0xff]
    %78 = vmatpush.msra.mxu0 %v61
    %79 = vmatpush.msra.mxu0 %v60
    %80 = vmatpush.msra.mxu0 %v59
    %81 = vmatpush.msra.mxu0 %v58
    %82 = vmatpush.msra.mxu0 %v57
    %83 = vmatpush.msra.mxu0 %v56
    %84 = vmatpush.msra.mxu0 %v55
    %85 = vmatpush.msra.mxu0 %v54
    %86 = vmatpush.msra.mxu0 %v53
    %87 = vmatpush.msra.mxu0 %v52
    %88 = vmatpush.msra.mxu0 %v51
    %89 = vmatpush.msra.mxu0 %v50
    %90 = vmatpush.msra.mxu0 %v49
    %91 = vmatpush.msra.mxu0 %v48
    %92 = vmatpush.msra.mxu0 %v47
    %93 = vmatpush.msra.mxu0 %v46
    %94 = vmatmul.f32.gmra.mxu0 %v42
    %v95 = vpop.f32.mrf.mxu0
    %v96 = vadd.f32 0.0, %v95
    %97 = vmatmul.f32.gmra.mxu0 %v44
    %v98 = vpop.f32.mrf.mxu0
    %v99 = vadd.f32 0.0, %v98
    %100 = vdwg.mxu0
    %101 = vmatpush.msra.mxu0 %v77
    %102 = vmatpush.msra.mxu0 %v76
    %103 = vmatpush.msra.mxu0 %v75
    %104 = vmatpush.msra.mxu0 %v74
    %105 = vmatpush.msra.mxu0 %v73
    %106 = vmatpush.msra.mxu0 %v72
    %107 = vmatpush.msra.mxu0 %v71
    %108 = vmatpush.msra.mxu0 %v70
    %109 = vmatpush.msra.mxu0 %v69
    %110 = vmatpush.msra.mxu0 %v68
    %111 = vmatpush.msra.mxu0 %v67
    %112 = vmatpush.msra.mxu0 %v66
    %113 = vmatpush.msra.mxu0 %v65
    %114 = vmatpush.msra.mxu0 %v64
    %115 = vmatpush.msra.mxu0 %v63
    %116 = vmatpush.msra.mxu0 %v62
    %117 = vmatmul.f32.gmra.mxu0 %v43
    %v118 = vpop.f32.mrf.mxu0
    %v119 = vadd.f32 %v96, %v118
    %120 = vmatmul.f32.gmra.mxu0 %v45
    %v121 = vpop.f32.mrf.mxu0
    %v122 = vadd.f32 %v99, %v121
    %123 = vdwg.mxu0
    %v124 = vld [vmem:[%s2] sm:$0xff]
    %v125 = vld [vmem:[%s2 + $0x8] sm:$0xff]
    %v126 = vld [vmem:[%s2 + $0x10] sm:$0xff]
    %v127 = vld [vmem:[%s2 + $0x18] sm:$0xff]
    %v128 = vld [vmem:[%s2 + $0x20] sm:$0xff]
    %v129 = vld [vmem:[%s2 + $0x28] sm:$0xff]
    %v130 = vld [vmem:[%s2 + $0x30] sm:$0xff]
    %v131 = vld [vmem:[%s2 + $0x38] sm:$0xff]
    %v132 = vld [vmem:[%s2 + $0x40] sm:$0xff]
    %v133 = vld [vmem:[%s2 + $0x48] sm:$0xff]
    %v134 = vld [vmem:[%s2 + $0x50] sm:$0xff]
    %v135 = vld [vmem:[%s2 + $0x58] sm:$0xff]
    %v136 = vld [vmem:[%s2 + $0x60] sm:$0xff]
    %v137 = vld [vmem:[%s2 + $0x68] sm:$0xff]
    %v138 = vld [vmem:[%s2 + $0x70] sm:$0xff]
    %v139 = vld [vmem:[%s2 + $0x78] sm:$0xff]
    %v140 = vld [vmem:[%s2 + $0x80] sm:$0xff]
    %v141 = vld [vmem:[%s2 + $0x88] sm:$0xff]
    %v142 = vld [vmem:[%s2 + $0x90] sm:$0xff]
    %v143 = vld [vmem:[%s2 + $0x98] sm:$0xff]
    %v144 = vld [vmem:[%s2 + $0xa0] sm:$0xff]
    %v145 = vld [vmem:[%s2 + $0xa8] sm:$0xff]
    %v146 = vld [vmem:[%s2 + $0xb0] sm:$0xff]
    %v147 = vld [vmem:[%s2 + $0xb8] sm:$0xff]
    %v148 = vld [vmem:[%s2 + $0xc0] sm:$0xff]
    %v149 = vld [vmem:[%s2 + $0xc8] sm:$0xff]
    %v150 = vld [vmem:[%s2 + $0xd0] sm:$0xff]
    %v151 = vld [vmem:[%s2 + $0xd8] sm:$0xff]
    %v152 = vld [vmem:[%s2 + $0xe0] sm:$0xff]
    %v153 = vld [vmem:[%s2 + $0xe8] sm:$0xff]
    %v154 = vld [vmem:[%s2 + $0xf0] sm:$0xff]
    %v155 = vld [vmem:[%s2 + $0xf8] sm:$0xff]
    %v156 = vld [vmem:[%s3] sm:$0xff]
    %v157 = vld [vmem:[%s3 + $0x8] sm:$0xff]
    %v158 = vld [vmem:[%s3 + $0x10] sm:$0xff]
    %v159 = vld [vmem:[%s3 + $0x18] sm:$0xff]
    %v160 = vld [vmem:[%s3 + $0x20] sm:$0xff]
    %v161 = vld [vmem:[%s3 + $0x28] sm:$0xff]
    %v162 = vld [vmem:[%s3 + $0x30] sm:$0xff]
    %v163 = vld [vmem:[%s3 + $0x38] sm:$0xff]
    %v164 = vld [vmem:[%s3 + $0x40] sm:$0xff]
    %v165 = vld [vmem:[%s3 + $0x48] sm:$0xff]
    %v166 = vld [vmem:[%s3 + $0x50] sm:$0xff]
    %v167 = vld [vmem:[%s3 + $0x58] sm:$0xff]
    %v168 = vld [vmem:[%s3 + $0x60] sm:$0xff]
    %v169 = vld [vmem:[%s3 + $0x68] sm:$0xff]
    %v170 = vld [vmem:[%s3 + $0x70] sm:$0xff]
    %v171 = vld [vmem:[%s3 + $0x78] sm:$0xff]
    %v172 = vld [vmem:[%s3 + $0x80] sm:$0xff]
    %v173 = vld [vmem:[%s3 + $0x88] sm:$0xff]
    %v174 = vld [vmem:[%s3 + $0x90] sm:$0xff]
    %v175 = vld [vmem:[%s3 + $0x98] sm:$0xff]
    %v176 = vld [vmem:[%s3 + $0xa0] sm:$0xff]
    %v177 = vld [vmem:[%s3 + $0xa8] sm:$0xff]
    %v178 = vld [vmem:[%s3 + $0xb0] sm:$0xff]
    %v179 = vld [vmem:[%s3 + $0xb8] sm:$0xff]
    %v180 = vld [vmem:[%s3 + $0xc0] sm:$0xff]
    %v181 = vld [vmem:[%s3 + $0xc8] sm:$0xff]
    %v182 = vld [vmem:[%s3 + $0xd0] sm:$0xff]
    %v183 = vld [vmem:[%s3 + $0xd8] sm:$0xff]
    %v184 = vld [vmem:[%s3 + $0xe0] sm:$0xff]
    %v185 = vld [vmem:[%s3 + $0xe8] sm:$0xff]
    %v186 = vld [vmem:[%s3 + $0xf0] sm:$0xff]
    %v187 = vld [vmem:[%s3 + $0xf8] sm:$0xff]
    %188 = vmatpush.msra.mxu0 %v171
    %189 = vmatpush.msra.mxu0 %v170
    %190 = vmatpush.msra.mxu0 %v169
    %191 = vmatpush.msra.mxu0 %v168
    %192 = vmatpush.msra.mxu0 %v167
    %193 = vmatpush.msra.mxu0 %v166
    %194 = vmatpush.msra.mxu0 %v165
    %195 = vmatpush.msra.mxu0 %v164
    %196 = vmatpush.msra.mxu0 %v163
    %197 = vmatpush.msra.mxu0 %v162
    %198 = vmatpush.msra.mxu0 %v161
    %199 = vmatpush.msra.mxu0 %v160
    %200 = vmatpush.msra.mxu0 %v159
    %201 = vmatpush.msra.mxu0 %v158
    %202 = vmatpush.msra.mxu0 %v157
    %203 = vmatpush.msra.mxu0 %v156
    %204 = vmatmul.f32.gmra.mxu0 %v42
    %v205 = vpop.f32.mrf.mxu0
    %v206 = vadd.f32 0.0, %v205
    %207 = vmatmul.f32.gmra.mxu0 %v44
    %v208 = vpop.f32.mrf.mxu0
    %v209 = vadd.f32 0.0, %v208
    %210 = vdwg.mxu0
    %211 = vmatpush.msra.mxu0 %v187
    %212 = vmatpush.msra.mxu0 %v186
    %213 = vmatpush.msra.mxu0 %v185
    %214 = vmatpush.msra.mxu0 %v184
    %215 = vmatpush.msra.mxu0 %v183
    %216 = vmatpush.msra.mxu0 %v182
    %217 = vmatpush.msra.mxu0 %v181
    %218 = vmatpush.msra.mxu0 %v180
    %219 = vmatpush.msra.mxu0 %v179
    %220 = vmatpush.msra.mxu0 %v178
    %221 = vmatpush.msra.mxu0 %v177
    %222 = vmatpush.msra.mxu0 %v176
    %223 = vmatpush.msra.mxu0 %v175
    %224 = vmatpush.msra.mxu0 %v174
    %225 = vmatpush.msra.mxu0 %v173
    %226 = vmatpush.msra.mxu0 %v172
    %227 = vmatmul.f32.gmra.mxu0 %v43
    %v228 = vpop.f32.mrf.mxu0
    %v229 = vadd.f32 %v206, %v228
    %230 = vmatmul.f32.gmra.mxu0 %v45
    %v231 = vpop.f32.mrf.mxu0
    %v232 = vadd.f32 %v209, %v231
    %233 = vdwg.mxu0
    %v234 = vlaneseq
    %v235 = vshrl.u32 %v234, 7
    %v236 = vadd.s32 %v235, 8
    %vm237 = vcmp.lt.s32.totalorder %v235, 0
    %v238 = vsub.s32 0, %v235
    %v239 = vsel %vm237, %v238, %v235
    %v240 = vshrl.u32 %v239, 3
    %v241 = vand.u32 %v239, 7
    %v242 = vsub.s32 0, %v241
    %v243 = vsel %vm237, %v242, %v241
    %vm244 = vcmp.lt.s32.totalorder %v236, 0
    %v245 = vsub.s32 0, %v236
    %v246 = vsel %vm244, %v245, %v236
    %v247 = vshrl.u32 %v246, 3
    %v248 = vand.u32 %v246, 7
    %v249 = vsub.s32 0, %v248
    %v250 = vsel %vm244, %v249, %v248
    %vm251 = vcmp.ne.s32.totalorder %v243, 0
    %vm252 = vcmp.ne.s32.totalorder %v250, 0
    %vm253 = vcmp.lt.s32.totalorder %v243, 0
    %vm254 = vcmp.lt.s32.totalorder %v250, 0
    %vm255 = vmand %vm253, %vm251
    %vm256 = vmand %vm254, %vm252
    %v257 = vadd.s32 %v243, 8
    %v258 = vadd.s32 %v250, 8
    %v259 = vsel %vm255, %v257, %v243
    %v260 = vsel %vm256, %v258, %v250
    %vm263 = vcmask 1040384
    %v264 = vrot.slane %v119, 7
    %v265 = vrot.slane %v122, 7
    %v266 = vsel %vm263, %v264, %v265
    %v269 = vsel %vm263, 0.0, %v264
    %vm272 = vcmask 1046528
    %v273 = vrot.slane %v229, 1
    %v274 = vrot.slane %v232, 1
    %v275 = vsel %vm272, %v273, %v274
    %v278 = vsel %vm272, %v274, 0.0
    %vm279 = vcmp.eq.s32.totalorder %v259, 0
    %vm280 = vcmp.eq.s32.totalorder %v260, 0
    %v281 = vsel %vm279, 0.0, %v269
    %v282 = vsel %vm280, 0.0, %v266
    %vm283 = vcmp.eq.s32.totalorder %v259, 7
    %vm284 = vcmp.eq.s32.totalorder %v260, 7
    %v285 = vsel %vm283, 0.0, %v275
    %v286 = vsel %vm284, 0.0, %v278
    %287 = vmatpush.msra.mxu0 %v139
    %288 = vmatpush.msra.mxu0 %v138
    %289 = vmatpush.msra.mxu0 %v137
    %290 = vmatpush.msra.mxu0 %v136
    %291 = vmatpush.msra.mxu0 %v135
    %292 = vmatpush.msra.mxu0 %v134
    %293 = vmatpush.msra.mxu0 %v133
    %294 = vmatpush.msra.mxu0 %v132
    %295 = vmatpush.msra.mxu0 %v131
    %296 = vmatpush.msra.mxu0 %v130
    %297 = vmatpush.msra.mxu0 %v129
    %298 = vmatpush.msra.mxu0 %v128
    %299 = vmatpush.msra.mxu0 %v127
    %300 = vmatpush.msra.mxu0 %v126
    %301 = vmatpush.msra.mxu0 %v125
    %302 = vmatpush.msra.mxu0 %v124
    %303 = vmatmul.f32.gmra.mxu0 %v42
    %v304 = vpop.f32.mrf.mxu0
    %v305 = vadd.f32 %v281, %v304
    %306 = vmatmul.f32.gmra.mxu0 %v44
    %v307 = vpop.f32.mrf.mxu0
    %v308 = vadd.f32 %v282, %v307
    %309 = vdwg.mxu0
    %310 = vmatpush.msra.mxu0 %v155
    %311 = vmatpush.msra.mxu0 %v154
    %312 = vmatpush.msra.mxu0 %v153
    %313 = vmatpush.msra.mxu0 %v152
    %314 = vmatpush.msra.mxu0 %v151
    %315 = vmatpush.msra.mxu0 %v150
    %316 = vmatpush.msra.mxu0 %v149
    %317 = vmatpush.msra.mxu0 %v148
    %318 = vmatpush.msra.mxu0 %v147
    %319 = vmatpush.msra.mxu0 %v146
    %320 = vmatpush.msra.mxu0 %v145
    %321 = vmatpush.msra.mxu0 %v144
    %322 = vmatpush.msra.mxu0 %v143
    %323 = vmatpush.msra.mxu0 %v142
    %324 = vmatpush.msra.mxu0 %v141
    %325 = vmatpush.msra.mxu0 %v140
    %326 = vmatmul.f32.gmra.mxu0 %v43
    %v327 = vpop.f32.mrf.mxu0
    %v328 = vadd.f32 %v305, %v327
    %329 = vmatmul.f32.gmra.mxu0 %v45
    %v330 = vpop.f32.mrf.mxu0
    %v331 = vadd.f32 %v308, %v330
    %332 = vdwg.mxu0
    %v333 = vadd.f32 %v328, %v285
    %v334 = vadd.f32 %v331, %v286
    %v335 = vld [vmem:[%s4] sm:$0x1]
    %v337 = vperm.slane %v335, 0
    %v339 = vadd.f32 %v333, %v337
    %v340 = vadd.f32 %v334, %v337
    %v341 = vmax.f32 %v339, 0.0
    %v342 = vmax.f32 %v340, 0.0
    %v343 = vld [vmem:[%s5] sm:$0xff]
    %v344 = vld [vmem:[%s5 + $0x8] sm:$0xff]
    %v345 = vld [vmem:[%s5 + $0x10] sm:$0xff]
    %v346 = vld [vmem:[%s5 + $0x18] sm:$0xff]
    %v347 = vld [vmem:[%s5 + $0x20] sm:$0xff]
    %v348 = vld [vmem:[%s5 + $0x28] sm:$0xff]
    %v349 = vld [vmem:[%s5 + $0x30] sm:$0xff]
    %v350 = vld [vmem:[%s5 + $0x38] sm:$0xff]
    %v351 = vld [vmem:[%s7] sm:$0x3]
    %v353 = vperm.slane %v351, 0
    %v354 = vperm.slane %v351, 1
    %vm357 = vcmask 261120
    %v359 = vsel %vm357, %v341, 0
    %v362 = vsel %vm357, %v342, 0
    %364 = vmatpush.msra.mxu0 0.0
    %365 = vmatpush.msra.mxu0 0.0
    %366 = vmatpush.msra.mxu0 0.0
    %367 = vmatpush.msra.mxu0 0.0
    %368 = vmatpush.msra.mxu0 0.0
    %369 = vmatpush.msra.mxu0 0.0
    %370 = vmatpush.msra.mxu0 0.0
    %371 = vmatpush.msra.mxu0 0.0
    %372 = vmatpush.msra.mxu0 0.0
    %373 = vmatpush.msra.mxu0 0.0
    %374 = vmatpush.msra.mxu0 0.0
    %375 = vmatpush.msra.mxu0 0.0
    %376 = vmatpush.msra.mxu0 %v349
    %377 = vmatpush.msra.mxu0 %v347
    %378 = vmatpush.msra.mxu0 %v345
    %379 = vmatpush.msra.mxu0 %v343
    %380 = vmatmul.f32.gmra.mxu0 %v359
    %v381 = vpop.f32.mrf.mxu0
    %v382 = vadd.f32 %v353, %v381
    %383 = vmatmul.f32.gmra.mxu0 %v362
    %v384 = vpop.f32.mrf.mxu0
    %v385 = vadd.f32 %v353, %v384
    %386 = vdwg.mxu0
    %387 = vmatpush.msra.mxu0 0.0
    %388 = vmatpush.msra.mxu0 0.0
    %389 = vmatpush.msra.mxu0 0.0
    %390 = vmatpush.msra.mxu0 0.0
    %391 = vmatpush.msra.mxu0 0.0
    %392 = vmatpush.msra.mxu0 0.0
    %393 = vmatpush.msra.mxu0 0.0
    %394 = vmatpush.msra.mxu0 0.0
    %395 = vmatpush.msra.mxu0 0.0
    %396 = vmatpush.msra.mxu0 0.0
    %397 = vmatpush.msra.mxu0 0.0
    %398 = vmatpush.msra.mxu0 0.0
    %399 = vmatpush.msra.mxu0 %v350
    %400 = vmatpush.msra.mxu0 %v348
    %401 = vmatpush.msra.mxu0 %v346
    %402 = vmatpush.msra.mxu0 %v344
    %403 = vmatmul.f32.gmra.mxu0 %v359
    %v404 = vpop.f32.mrf.mxu0
    %v405 = vadd.f32 %v354, %v404
    %406 = vmatmul.f32.gmra.mxu0 %v362
    %v407 = vpop.f32.mrf.mxu0
    %v408 = vadd.f32 %v354, %v407
    %409 = vdwg.mxu0
    %v410 = vld [vmem:[%s6] sm:$0xff]
    %v411 = vld [vmem:[%s6 + $0x8] sm:$0xff]
    %v412 = vld [vmem:[%s6 + $0x10] sm:$0xff]
    %v413 = vld [vmem:[%s6 + $0x18] sm:$0xff]
    %v414 = vld [vmem:[%s6 + $0x20] sm:$0xff]
    %v415 = vld [vmem:[%s6 + $0x28] sm:$0xff]
    %v416 = vld [vmem:[%s6 + $0x30] sm:$0xff]
    %v417 = vld [vmem:[%s6 + $0x38] sm:$0xff]
    %418 = vmatpush.msra.mxu0 0.0
    %419 = vmatpush.msra.mxu0 0.0
    %420 = vmatpush.msra.mxu0 0.0
    %421 = vmatpush.msra.mxu0 0.0
    %422 = vmatpush.msra.mxu0 0.0
    %423 = vmatpush.msra.mxu0 0.0
    %424 = vmatpush.msra.mxu0 0.0
    %425 = vmatpush.msra.mxu0 0.0
    %426 = vmatpush.msra.mxu0 0.0
    %427 = vmatpush.msra.mxu0 0.0
    %428 = vmatpush.msra.mxu0 0.0
    %429 = vmatpush.msra.mxu0 0.0
    %430 = vmatpush.msra.mxu0 %v416
    %431 = vmatpush.msra.mxu0 %v414
    %432 = vmatpush.msra.mxu0 %v412
    %433 = vmatpush.msra.mxu0 %v410
    %434 = vmatmul.f32.gmra.mxu0 %v359
    %v435 = vpop.f32.mrf.mxu0
    %v436 = vadd.f32 0.0, %v435
    %437 = vmatmul.f32.gmra.mxu0 %v362
    %v438 = vpop.f32.mrf.mxu0
    %v439 = vadd.f32 0.0, %v438
    %440 = vdwg.mxu0
    %441 = vmatpush.msra.mxu0 0.0
    %442 = vmatpush.msra.mxu0 0.0
    %443 = vmatpush.msra.mxu0 0.0
    %444 = vmatpush.msra.mxu0 0.0
    %445 = vmatpush.msra.mxu0 0.0
    %446 = vmatpush.msra.mxu0 0.0
    %447 = vmatpush.msra.mxu0 0.0
    %448 = vmatpush.msra.mxu0 0.0
    %449 = vmatpush.msra.mxu0 0.0
    %450 = vmatpush.msra.mxu0 0.0
    %451 = vmatpush.msra.mxu0 0.0
    %452 = vmatpush.msra.mxu0 0.0
    %453 = vmatpush.msra.mxu0 %v417
    %454 = vmatpush.msra.mxu0 %v415
    %455 = vmatpush.msra.mxu0 %v413
    %456 = vmatpush.msra.mxu0 %v411
    %457 = vmatmul.f32.gmra.mxu0 %v359
    %v458 = vpop.f32.mrf.mxu0
    %v459 = vadd.f32 0.0, %v458
    %460 = vmatmul.f32.gmra.mxu0 %v362
    %v461 = vpop.f32.mrf.mxu0
    %v462 = vadd.f32 0.0, %v461
    %463 = vdwg.mxu0
    %v464 = vld [vmem:[%s8] sm:$0xff]
    %v465 = vld [vmem:[%s8 + $0x8] sm:$0xff]
    %v466 = vld [vmem:[%s8 + $0x10] sm:$0xff]
    %v467 = vld [vmem:[%s8 + $0x18] sm:$0xff]
    %v468 = vld [vmem:[%s8 + $0x20] sm:$0xff]
    %v469 = vld [vmem:[%s8 + $0x28] sm:$0xff]
    %v470 = vld [vmem:[%s8 + $0x30] sm:$0xff]
    %v471 = vld [vmem:[%s8 + $0x38] sm:$0xff]
    %v472 = vld [vmem:[%s8 + $0x40] sm:$0xff]
    %v473 = vld [vmem:[%s8 + $0x48] sm:$0xff]
    %v474 = vld [vmem:[%s8 + $0x50] sm:$0xff]
    %v475 = vld [vmem:[%s8 + $0x58] sm:$0xff]
    %v476 = vld [vmem:[%s8 + $0x60] sm:$0xff]
    %v477 = vld [vmem:[%s8 + $0x68] sm:$0xff]
    %v478 = vld [vmem:[%s8 + $0x70] sm:$0xff]
    %v479 = vld [vmem:[%s8 + $0x78] sm:$0xff]
    %v482 = vrot.slane %v385, 7
    %v483 = vrot.slane %v408, 7
    %v486 = vsel %vm263, %v382, %v482
    %v487 = vsel %vm263, %v405, %v483
    %v490 = vrot.slane %v436, 7
    %v491 = vrot.slane %v459, 7
    %v496 = vrot.slane %v439, 6
    %v497 = vrot.slane %v462, 6
    %v500 = vsel %vm263, %v490, %v496
    %v501 = vsel %vm263, %v491, %v497
    %v502 = vadd.f32 %v486, %v500
    %v503 = vadd.f32 %v487, %v501
    %v504 = vxor.u32 %v502, 2147483648
    %v505 = vxor.u32 %v503, 2147483648
    %v506 = vmul.f32 %v504, 1.442695
    %v507 = vpow.pop %v506
    %v508 = vmul.f32 %v505, 1.442695
    %v509 = vpow.pop %v508
    %v510 = vadd.f32 %v507, 1.0
    %v511 = vadd.f32 %v509, 1.0
    %v512 = vrcp.pop %v510
    %v513 = vmul.f32 %v510, %v512
    %v514 = vsub.f32 1.0, %v513
    %v515 = vmul.f32 %v512, %v514
    %v516 = vadd.f32 %v512, %v515
    %vm517 = vweird.f32 %v510
    %vm518 = vweird.f32 %v512
    %vm519 = vmor %vm517, %vm518
    %v520 = vsel %vm519, %v512, %v516
    %v521 = vand.u32 2147483647, %v510
    %vm522 = vcmp.eq.f32.partialorder %v521, 8.507059e+37
    %v523 = vand.u32 %v510, 2147483648
    %v524 = vor.u32 1.1754944e-38, %v523
    %v525 = vsel %vm522, %v524, %v520
    %v526 = vmul.f32 1.0, %v525
    %v527 = vrcp.pop %v511
    %v528 = vmul.f32 %v511, %v527
    %v529 = vsub.f32 1.0, %v528
    %v530 = vmul.f32 %v527, %v529
    %v531 = vadd.f32 %v527, %v530
    %vm532 = vweird.f32 %v511
    %vm533 = vweird.f32 %v527
    %vm534 = vmor %vm532, %vm533
    %v535 = vsel %vm534, %v527, %v531
    %v536 = vand.u32 2147483647, %v511
    %vm537 = vcmp.eq.f32.partialorder %v536, 8.507059e+37
    %v538 = vand.u32 %v511, 2147483648
    %v539 = vor.u32 1.1754944e-38, %v538
    %v540 = vsel %vm537, %v539, %v535
    %v541 = vmul.f32 1.0, %v540
    %v542 = vtanh.pop %v503
    %v543 = vmul.f32 %v526, 0.0
    %545 = vrot.lane.b32.xlu0 %v542, 64
    %v546 = vpop.permute.xlu0 %545
    %v548 = vmul.f32 %v526, %v546
    %550 = vrot.lane.b32.xlu0 %v548, 64
    %v551 = vpop.permute.xlu0 %550
    %v553 = vadd.f32 %v543, %v551
    %v554 = vtanh.pop %v553
    %556 = vrot.lane.b32.xlu0 %v554, 64
    %v557 = vpop.permute.xlu0 %556
    %v559 = vmul.f32 %v541, %v557
    %v562 = vrot.slane %v382, 1
    %v563 = vrot.slane %v405, 1
    %v566 = vsel %vm263, %v562, %v385
    %v567 = vsel %vm263, %v563, %v408
    %v568 = vrot.slane %v436, 6
    %v569 = vrot.slane %v459, 6
    %v572 = vrot.slane %v439, 5
    %v573 = vrot.slane %v462, 5
    %v576 = vsel %vm263, %v568, %v572
    %v577 = vsel %vm263, %v569, %v573
    %v578 = vadd.f32 %v566, %v576
    %v579 = vadd.f32 %v567, %v577
    %vm580 = vcmask 523264
    %v582 = vsel %vm580, %v559, 0
    %584 = vmatpush.msra.mxu0 0.0
    %585 = vmatpush.msra.mxu0 0.0
    %586 = vmatpush.msra.mxu0 0.0
    %587 = vmatpush.msra.mxu0 0.0
    %588 = vmatpush.msra.mxu0 0.0
    %589 = vmatpush.msra.mxu0 0.0
    %590 = vmatpush.msra.mxu0 0.0
    %591 = vmatpush.msra.mxu0 0.0
    %592 = vmatpush.msra.mxu0 %v478
    %593 = vmatpush.msra.mxu0 %v476
    %594 = vmatpush.msra.mxu0 %v474
    %595 = vmatpush.msra.mxu0 %v472
    %596 = vmatpush.msra.mxu0 %v470
    %597 = vmatpush.msra.mxu0 %v468
    %598 = vmatpush.msra.mxu0 %v466
    %599 = vmatpush.msra.mxu0 %v464
    %600 = vmatmul.f32.gmra.mxu0 %v582
    %v601 = vpop.f32.mrf.mxu0
    %v602 = vadd.f32 0.0, %v601
    %603 = vdwg.mxu0
    %604 = vmatpush.msra.mxu0 0.0
    %605 = vmatpush.msra.mxu0 0.0
    %606 = vmatpush.msra.mxu0 0.0
    %607 = vmatpush.msra.mxu0 0.0
    %608 = vmatpush.msra.mxu0 0.0
    %609 = vmatpush.msra.mxu0 0.0
    %610 = vmatpush.msra.mxu0 0.0
    %611 = vmatpush.msra.mxu0 0.0
    %612 = vmatpush.msra.mxu0 %v479
    %613 = vmatpush.msra.mxu0 %v477
    %614 = vmatpush.msra.mxu0 %v475
    %615 = vmatpush.msra.mxu0 %v473
    %616 = vmatpush.msra.mxu0 %v471
    %617 = vmatpush.msra.mxu0 %v469
    %618 = vmatpush.msra.mxu0 %v467
    %619 = vmatpush.msra.mxu0 %v465
    %620 = vmatmul.f32.gmra.mxu0 %v582
    %v621 = vpop.f32.mrf.mxu0
    %v622 = vadd.f32 0.0, %v621
    %623 = vdwg.mxu0
    %v624 = vadd.f32 %v578, %v602
    %v625 = vadd.f32 %v579, %v622
    %v626 = vxor.u32 %v624, 2147483648
    %v627 = vxor.u32 %v625, 2147483648
    %v628 = vmul.f32 %v626, 1.442695
    %v629 = vpow.pop %v628
    %v630 = vmul.f32 %v627, 1.442695
    %v631 = vpow.pop %v630
    %v632 = vadd.f32 %v629, 1.0
    %v633 = vadd.f32 %v631, 1.0
    %v634 = vrcp.pop %v632
    %v635 = vmul.f32 %v632, %v634
    %v636 = vsub.f32 1.0, %v635
    %v637 = vmul.f32 %v634, %v636
    %v638 = vadd.f32 %v634, %v637
    %vm639 = vweird.f32 %v632
    %vm640 = vweird.f32 %v634
    %vm641 = vmor %vm639, %vm640
    %v642 = vsel %vm641, %v634, %v638
    %v643 = vand.u32 2147483647, %v632
    %vm644 = vcmp.eq.f32.partialorder %v643, 8.507059e+37
    %v645 = vand.u32 %v632, 2147483648
    %v646 = vor.u32 1.1754944e-38, %v645
    %v647 = vsel %vm644, %v646, %v642
    %v648 = vmul.f32 1.0, %v647
    %v649 = vrcp.pop %v633
    %v650 = vmul.f32 %v633, %v649
    %v651 = vsub.f32 1.0, %v650
    %v652 = vmul.f32 %v649, %v651
    %v653 = vadd.f32 %v649, %v652
    %vm654 = vweird.f32 %v633
    %vm655 = vweird.f32 %v649
    %vm656 = vmor %vm654, %vm655
    %v657 = vsel %vm656, %v649, %v653
    %v658 = vand.u32 2147483647, %v633
    %vm659 = vcmp.eq.f32.partialorder %v658, 8.507059e+37
    %v660 = vand.u32 %v633, 2147483648
    %v661 = vor.u32 1.1754944e-38, %v660
    %v662 = vsel %vm659, %v661, %v657
    %v663 = vmul.f32 1.0, %v662
    %v664 = vtanh.pop %v625
    %v665 = vmul.f32 %v648, %v553
    %667 = vrot.lane.b32.xlu0 %v664, 64
    %v668 = vpop.permute.xlu0 %667
    %v670 = vmul.f32 %v648, %v668
    %672 = vrot.lane.b32.xlu0 %v670, 64
    %v673 = vpop.permute.xlu0 %672
    %v675 = vadd.f32 %v665, %v673
    %v676 = vtanh.pop %v675
    %678 = vrot.lane.b32.xlu0 %v676, 64
    %v679 = vpop.permute.xlu0 %678
    %v681 = vmul.f32 %v663, %v679
    %v682 = vrot.slane %v382, 2
    %v683 = vrot.slane %v405, 2
    %v686 = vrot.slane %v385, 1
    %v687 = vrot.slane %v408, 1
    %v690 = vsel %vm263, %v682, %v686
    %v691 = vsel %vm263, %v683, %v687
    %v692 = vrot.slane %v436, 5
    %v693 = vrot.slane %v459, 5
    %v696 = vrot.slane %v439, 4
    %v697 = vrot.slane %v462, 4
    %v700 = vsel %vm263, %v692, %v696
    %v701 = vsel %vm263, %v693, %v697
    %v702 = vadd.f32 %v690, %v700
    %v703 = vadd.f32 %v691, %v701
    %v705 = vsel %vm580, %v681, 0
    %707 = vmatpush.msra.mxu0 0.0
    %708 = vmatpush.msra.mxu0 0.0
    %709 = vmatpush.msra.mxu0 0.0
    %710 = vmatpush.msra.mxu0 0.0
    %711 = vmatpush.msra.mxu0 0.0
    %712 = vmatpush.msra.mxu0 0.0
    %713 = vmatpush.msra.mxu0 0.0
    %714 = vmatpush.msra.mxu0 0.0
    %715 = vmatpush.msra.mxu0 %v478
    %716 = vmatpush.msra.mxu0 %v476
    %717 = vmatpush.msra.mxu0 %v474
    %718 = vmatpush.msra.mxu0 %v472
    %719 = vmatpush.msra.mxu0 %v470
    %720 = vmatpush.msra.mxu0 %v468
    %721 = vmatpush.msra.mxu0 %v466
    %722 = vmatpush.msra.mxu0 %v464
    %723 = vmatmul.f32.gmra.mxu0 %v705
    %v724 = vpop.f32.mrf.mxu0
    %v725 = vadd.f32 0.0, %v724
    %726 = vdwg.mxu0
    %727 = vmatpush.msra.mxu0 0.0
    %728 = vmatpush.msra.mxu0 0.0
    %729 = vmatpush.msra.mxu0 0.0
    %730 = vmatpush.msra.mxu0 0.0
    %731 = vmatpush.msra.mxu0 0.0
    %732 = vmatpush.msra.mxu0 0.0
    %733 = vmatpush.msra.mxu0 0.0
    %734 = vmatpush.msra.mxu0 0.0
    %735 = vmatpush.msra.mxu0 %v479
    %736 = vmatpush.msra.mxu0 %v477
    %737 = vmatpush.msra.mxu0 %v475
    %738 = vmatpush.msra.mxu0 %v473
    %739 = vmatpush.msra.mxu0 %v471
    %740 = vmatpush.msra.mxu0 %v469
    %741 = vmatpush.msra.mxu0 %v467
    %742 = vmatpush.msra.mxu0 %v465
    %743 = vmatmul.f32.gmra.mxu0 %v705
    %v744 = vpop.f32.mrf.mxu0
    %v745 = vadd.f32 0.0, %v744
    %746 = vdwg.mxu0
    %v747 = vadd.f32 %v702, %v725
    %v748 = vadd.f32 %v703, %v745
    %v749 = vxor.u32 %v747, 2147483648
    %v750 = vxor.u32 %v748, 2147483648
    %v751 = vmul.f32 %v749, 1.442695
    %v752 = vpow.pop %v751
    %v753 = vmul.f32 %v750, 1.442695
    %v754 = vpow.pop %v753
    %v755 = vadd.f32 %v752, 1.0
    %v756 = vadd.f32 %v754, 1.0
    %v757 = vrcp.pop %v755
    %v758 = vmul.f32 %v755, %v757
    %v759 = vsub.f32 1.0, %v758
    %v760 = vmul.f32 %v757, %v759
    %v761 = vadd.f32 %v757, %v760
    %vm762 = vweird.f32 %v755
    %vm763 = vweird.f32 %v757
    %vm764 = vmor %vm762, %vm763
    %v765 = vsel %vm764, %v757, %v761
    %v766 = vand.u32 2147483647, %v755
    %vm767 = vcmp.eq.f32.partialorder %v766, 8.507059e+37
    %v768 = vand.u32 %v755, 2147483648
    %v769 = vor.u32 1.1754944e-38, %v768
    %v770 = vsel %vm767, %v769, %v765
    %v771 = vmul.f32 1.0, %v770
    %v772 = vrcp.pop %v756
    %v773 = vmul.f32 %v756, %v772
    %v774 = vsub.f32 1.0, %v773
    %v775 = vmul.f32 %v772, %v774
    %v776 = vadd.f32 %v772, %v775
    %vm777 = vweird.f32 %v756
    %vm778 = vweird.f32 %v772
    %vm779 = vmor %vm777, %vm778
    %v780 = vsel %vm779, %v772, %v776
    %v781 = vand.u32 2147483647, %v756
    %vm782 = vcmp.eq.f32.partialorder %v781, 8.507059e+37
    %v783 = vand.u32 %v756, 2147483648
    %v784 = vor.u32 1.1754944e-38, %v783
    %v785 = vsel %vm782, %v784, %v780
    %v786 = vmul.f32 1.0, %v785
    %v787 = vtanh.pop %v748
    %v788 = vmul.f32 %v771, %v675
    %790 = vrot.lane.b32.xlu0 %v787, 64
    %v791 = vpop.permute.xlu0 %790
    %v793 = vmul.f32 %v771, %v791
    %795 = vrot.lane.b32.xlu0 %v793, 64
    %v796 = vpop.permute.xlu0 %795
    %v798 = vadd.f32 %v788, %v796
    %v799 = vtanh.pop %v798
    %801 = vrot.lane.b32.xlu0 %v799, 64
    %v802 = vpop.permute.xlu0 %801
    %v804 = vmul.f32 %v786, %v802
    %v805 = vrot.slane %v382, 3
    %v806 = vrot.slane %v405, 3
    %v809 = vrot.slane %v385, 2
    %v810 = vrot.slane %v408, 2
    %v813 = vsel %vm263, %v805, %v809
    %v814 = vsel %vm263, %v806, %v810
    %v815 = vrot.slane %v436, 4
    %v816 = vrot.slane %v459, 4
    %v819 = vrot.slane %v439, 3
    %v820 = vrot.slane %v462, 3
    %v823 = vsel %vm263, %v815, %v819
    %v824 = vsel %vm263, %v816, %v820
    %v825 = vadd.f32 %v813, %v823
    %v826 = vadd.f32 %v814, %v824
    %v828 = vsel %vm580, %v804, 0
    %830 = vmatpush.msra.mxu0 0.0
    %831 = vmatpush.msra.mxu0 0.0
    %832 = vmatpush.msra.mxu0 0.0
    %833 = vmatpush.msra.mxu0 0.0
    %834 = vmatpush.msra.mxu0 0.0
    %835 = vmatpush.msra.mxu0 0.0
    %836 = vmatpush.msra.mxu0 0.0
    %837 = vmatpush.msra.mxu0 0.0
    %838 = vmatpush.msra.mxu0 %v478
    %839 = vmatpush.msra.mxu0 %v476
    %840 = vmatpush.msra.mxu0 %v474
    %841 = vmatpush.msra.mxu0 %v472
    %842 = vmatpush.msra.mxu0 %v470
    %843 = vmatpush.msra.mxu0 %v468
    %844 = vmatpush.msra.mxu0 %v466
    %845 = vmatpush.msra.mxu0 %v464
    %846 = vmatmul.f32.gmra.mxu0 %v828
    %v847 = vpop.f32.mrf.mxu0
    %v848 = vadd.f32 0.0, %v847
    %849 = vdwg.mxu0
    %850 = vmatpush.msra.mxu0 0.0
    %851 = vmatpush.msra.mxu0 0.0
    %852 = vmatpush.msra.mxu0 0.0
    %853 = vmatpush.msra.mxu0 0.0
    %854 = vmatpush.msra.mxu0 0.0
    %855 = vmatpush.msra.mxu0 0.0
    %856 = vmatpush.msra.mxu0 0.0
    %857 = vmatpush.msra.mxu0 0.0
    %858 = vmatpush.msra.mxu0 %v479
    %859 = vmatpush.msra.mxu0 %v477
    %860 = vmatpush.msra.mxu0 %v475
    %861 = vmatpush.msra.mxu0 %v473
    %862 = vmatpush.msra.mxu0 %v471
    %863 = vmatpush.msra.mxu0 %v469
    %864 = vmatpush.msra.mxu0 %v467
    %865 = vmatpush.msra.mxu0 %v465
    %866 = vmatmul.f32.gmra.mxu0 %v828
    %v867 = vpop.f32.mrf.mxu0
    %v868 = vadd.f32 0.0, %v867
    %869 = vdwg.mxu0
    %v870 = vadd.f32 %v825, %v848
    %v871 = vadd.f32 %v826, %v868
    %v872 = vxor.u32 %v870, 2147483648
    %v873 = vxor.u32 %v871, 2147483648
    %v874 = vmul.f32 %v872, 1.442695
    %v875 = vpow.pop %v874
    %v876 = vmul.f32 %v873, 1.442695
    %v877 = vpow.pop %v876
    %v878 = vadd.f32 %v875, 1.0
    %v879 = vadd.f32 %v877, 1.0
    %v880 = vrcp.pop %v878
    %v881 = vmul.f32 %v878, %v880
    %v882 = vsub.f32 1.0, %v881
    %v883 = vmul.f32 %v880, %v882
    %v884 = vadd.f32 %v880, %v883
    %vm885 = vweird.f32 %v878
    %vm886 = vweird.f32 %v880
    %vm887 = vmor %vm885, %vm886
    %v888 = vsel %vm887, %v880, %v884
    %v889 = vand.u32 2147483647, %v878
    %vm890 = vcmp.eq.f32.partialorder %v889, 8.507059e+37
    %v891 = vand.u32 %v878, 2147483648
    %v892 = vor.u32 1.1754944e-38, %v891
    %v893 = vsel %vm890, %v892, %v888
    %v894 = vmul.f32 1.0, %v893
    %v895 = vrcp.pop %v879
    %v896 = vmul.f32 %v879, %v895
    %v897 = vsub.f32 1.0, %v896
    %v898 = vmul.f32 %v895, %v897
    %v899 = vadd.f32 %v895, %v898
    %vm900 = vweird.f32 %v879
    %vm901 = vweird.f32 %v895
    %vm902 = vmor %vm900, %vm901
    %v903 = vsel %vm902, %v895, %v899
    %v904 = vand.u32 2147483647, %v879
    %vm905 = vcmp.eq.f32.partialorder %v904, 8.507059e+37
    %v906 = vand.u32 %v879, 2147483648
    %v907 = vor.u32 1.1754944e-38, %v906
    %v908 = vsel %vm905, %v907, %v903
    %v909 = vmul.f32 1.0, %v908
    %v910 = vtanh.pop %v871
    %v911 = vmul.f32 %v894, %v798
    %913 = vrot.lane.b32.xlu0 %v910, 64
    %v914 = vpop.permute.xlu0 %913
    %v916 = vmul.f32 %v894, %v914
    %918 = vrot.lane.b32.xlu0 %v916, 64
    %v919 = vpop.permute.xlu0 %918
    %v921 = vadd.f32 %v911, %v919
    %v922 = vtanh.pop %v921
    %924 = vrot.lane.b32.xlu0 %v922, 64
    %v925 = vpop.permute.xlu0 %924
    %v927 = vmul.f32 %v909, %v925
    %v928 = vrot.slane %v382, 4
    %v929 = vrot.slane %v405, 4
    %v932 = vrot.slane %v385, 3
    %v933 = vrot.slane %v408, 3
    %v936 = vsel %vm263, %v928, %v932
    %v937 = vsel %vm263, %v929, %v933
    %v938 = vrot.slane %v436, 3
    %v939 = vrot.slane %v459, 3
    %v942 = vrot.slane %v439, 2
    %v943 = vrot.slane %v462, 2
    %v946 = vsel %vm263, %v938, %v942
    %v947 = vsel %vm263, %v939, %v943
    %v948 = vadd.f32 %v936, %v946
    %v949 = vadd.f32 %v937, %v947
    %v951 = vsel %vm580, %v927, 0
    %953 = vmatpush.msra.mxu0 0.0
    %954 = vmatpush.msra.mxu0 0.0
    %955 = vmatpush.msra.mxu0 0.0
    %956 = vmatpush.msra.mxu0 0.0
    %957 = vmatpush.msra.mxu0 0.0
    %958 = vmatpush.msra.mxu0 0.0
    %959 = vmatpush.msra.mxu0 0.0
    %960 = vmatpush.msra.mxu0 0.0
    %961 = vmatpush.msra.mxu0 %v478
    %962 = vmatpush.msra.mxu0 %v476
    %963 = vmatpush.msra.mxu0 %v474
    %964 = vmatpush.msra.mxu0 %v472
    %965 = vmatpush.msra.mxu0 %v470
    %966 = vmatpush.msra.mxu0 %v468
    %967 = vmatpush.msra.mxu0 %v466
    %968 = vmatpush.msra.mxu0 %v464
    %969 = vmatmul.f32.gmra.mxu0 %v951
    %v970 = vpop.f32.mrf.mxu0
    %v971 = vadd.f32 0.0, %v970
    %972 = vdwg.mxu0
    %973 = vmatpush.msra.mxu0 0.0
    %974 = vmatpush.msra.mxu0 0.0
    %975 = vmatpush.msra.mxu0 0.0
    %976 = vmatpush.msra.mxu0 0.0
    %977 = vmatpush.msra.mxu0 0.0
    %978 = vmatpush.msra.mxu0 0.0
    %979 = vmatpush.msra.mxu0 0.0
    %980 = vmatpush.msra.mxu0 0.0
    %981 = vmatpush.msra.mxu0 %v479
    %982 = vmatpush.msra.mxu0 %v477
    %983 = vmatpush.msra.mxu0 %v475
    %984 = vmatpush.msra.mxu0 %v473
    %985 = vmatpush.msra.mxu0 %v471
    %986 = vmatpush.msra.mxu0 %v469
    %987 = vmatpush.msra.mxu0 %v467
    %988 = vmatpush.msra.mxu0 %v465
    %989 = vmatmul.f32.gmra.mxu0 %v951
    %v990 = vpop.f32.mrf.mxu0
    %v991 = vadd.f32 0.0, %v990
    %992 = vdwg.mxu0
    %v993 = vadd.f32 %v948, %v971
    %v994 = vadd.f32 %v949, %v991
    %v995 = vxor.u32 %v993, 2147483648
    %v996 = vxor.u32 %v994, 2147483648
    %v997 = vmul.f32 %v995, 1.442695
    %v998 = vpow.pop %v997
    %v999 = vmul.f32 %v996, 1.442695
    %v1000 = vpow.pop %v999
    %v1001 = vadd.f32 %v998, 1.0
    %v1002 = vadd.f32 %v1000, 1.0
    %v1003 = vrcp.pop %v1001
    %v1004 = vmul.f32 %v1001, %v1003
    %v1005 = vsub.f32 1.0, %v1004
    %v1006 = vmul.f32 %v1003, %v1005
    %v1007 = vadd.f32 %v1003, %v1006
    %vm1008 = vweird.f32 %v1001
    %vm1009 = vweird.f32 %v1003
    %vm1010 = vmor %vm1008, %vm1009
    %v1011 = vsel %vm1010, %v1003, %v1007
    %v1012 = vand.u32 2147483647, %v1001
    %vm1013 = vcmp.eq.f32.partialorder %v1012, 8.507059e+37
    %v1014 = vand.u32 %v1001, 2147483648
    %v1015 = vor.u32 1.1754944e-38, %v1014
    %v1016 = vsel %vm1013, %v1015, %v1011
    %v1017 = vmul.f32 1.0, %v1016
    %v1018 = vrcp.pop %v1002
    %v1019 = vmul.f32 %v1002, %v1018
    %v1020 = vsub.f32 1.0, %v1019
    %v1021 = vmul.f32 %v1018, %v1020
    %v1022 = vadd.f32 %v1018, %v1021
    %vm1023 = vweird.f32 %v1002
    %vm1024 = vweird.f32 %v1018
    %vm1025 = vmor %vm1023, %vm1024
    %v1026 = vsel %vm1025, %v1018, %v1022
    %v1027 = vand.u32 2147483647, %v1002
    %vm1028 = vcmp.eq.f32.partialorder %v1027, 8.507059e+37
    %v1029 = vand.u32 %v1002, 2147483648
    %v1030 = vor.u32 1.1754944e-38, %v1029
    %v1031 = vsel %vm1028, %v1030, %v1026
    %v1032 = vmul.f32 1.0, %v1031
    %v1033 = vtanh.pop %v994
    %v1034 = vmul.f32 %v1017, %v921
    %1036 = vrot.lane.b32.xlu0 %v1033, 64
    %v1037 = vpop.permute.xlu0 %1036
    %v1039 = vmul.f32 %v1017, %v1037
    %1041 = vrot.lane.b32.xlu0 %v1039, 64
    %v1042 = vpop.permute.xlu0 %1041
    %v1044 = vadd.f32 %v1034, %v1042
    %v1045 = vtanh.pop %v1044
    %1047 = vrot.lane.b32.xlu0 %v1045, 64
    %v1048 = vpop.permute.xlu0 %1047
    %v1050 = vmul.f32 %v1032, %v1048
    %v1051 = vrot.slane %v382, 5
    %v1052 = vrot.slane %v405, 5
    %v1055 = vrot.slane %v385, 4
    %v1056 = vrot.slane %v408, 4
    %v1059 = vsel %vm263, %v1051, %v1055
    %v1060 = vsel %vm263, %v1052, %v1056
    %v1061 = vrot.slane %v436, 2
    %v1062 = vrot.slane %v459, 2
    %v1065 = vrot.slane %v439, 1
    %v1066 = vrot.slane %v462, 1
    %v1069 = vsel %vm263, %v1061, %v1065
    %v1070 = vsel %vm263, %v1062, %v1066
    %v1071 = vadd.f32 %v1059, %v1069
    %v1072 = vadd.f32 %v1060, %v1070
    %v1074 = vsel %vm580, %v1050, 0
    %1076 = vmatpush.msra.mxu0 0.0
    %1077 = vmatpush.msra.mxu0 0.0
    %1078 = vmatpush.msra.mxu0 0.0
    %1079 = vmatpush.msra.mxu0 0.0
    %1080 = vmatpush.msra.mxu0 0.0
    %1081 = vmatpush.msra.mxu0 0.0
    %1082 = vmatpush.msra.mxu0 0.0
    %1083 = vmatpush.msra.mxu0 0.0
    %1084 = vmatpush.msra.mxu0 %v478
    %1085 = vmatpush.msra.mxu0 %v476
    %1086 = vmatpush.msra.mxu0 %v474
    %1087 = vmatpush.msra.mxu0 %v472
    %1088 = vmatpush.msra.mxu0 %v470
    %1089 = vmatpush.msra.mxu0 %v468
    %1090 = vmatpush.msra.mxu0 %v466
    %1091 = vmatpush.msra.mxu0 %v464
    %1092 = vmatmul.f32.gmra.mxu0 %v1074
    %v1093 = vpop.f32.mrf.mxu0
    %v1094 = vadd.f32 0.0, %v1093
    %1095 = vdwg.mxu0
    %1096 = vmatpush.msra.mxu0 0.0
    %1097 = vmatpush.msra.mxu0 0.0
    %1098 = vmatpush.msra.mxu0 0.0
    %1099 = vmatpush.msra.mxu0 0.0
    %1100 = vmatpush.msra.mxu0 0.0
    %1101 = vmatpush.msra.mxu0 0.0
    %1102 = vmatpush.msra.mxu0 0.0
    %1103 = vmatpush.msra.mxu0 0.0
    %1104 = vmatpush.msra.mxu0 %v479
    %1105 = vmatpush.msra.mxu0 %v477
    %1106 = vmatpush.msra.mxu0 %v475
    %1107 = vmatpush.msra.mxu0 %v473
    %1108 = vmatpush.msra.mxu0 %v471
    %1109 = vmatpush.msra.mxu0 %v469
    %1110 = vmatpush.msra.mxu0 %v467
    %1111 = vmatpush.msra.mxu0 %v465
    %1112 = vmatmul.f32.gmra.mxu0 %v1074
    %v1113 = vpop.f32.mrf.mxu0
    %v1114 = vadd.f32 0.0, %v1113
    %1115 = vdwg.mxu0
    %v1116 = vadd.f32 %v1071, %v1094
    %v1117 = vadd.f32 %v1072, %v1114
    %v1118 = vxor.u32 %v1116, 2147483648
    %v1119 = vxor.u32 %v1117, 2147483648
    %v1120 = vmul.f32 %v1118, 1.442695
    %v1121 = vpow.pop %v1120
    %v1122 = vmul.f32 %v1119, 1.442695
    %v1123 = vpow.pop %v1122
    %v1124 = vadd.f32 %v1121, 1.0
    %v1125 = vadd.f32 %v1123, 1.0
    %v1126 = vrcp.pop %v1124
    %v1127 = vmul.f32 %v1124, %v1126
    %v1128 = vsub.f32 1.0, %v1127
    %v1129 = vmul.f32 %v1126, %v1128
    %v1130 = vadd.f32 %v1126, %v1129
    %vm1131 = vweird.f32 %v1124
    %vm1132 = vweird.f32 %v1126
    %vm1133 = vmor %vm1131, %vm1132
    %v1134 = vsel %vm1133, %v1126, %v1130
    %v1135 = vand.u32 2147483647, %v1124
    %vm1136 = vcmp.eq.f32.partialorder %v1135, 8.507059e+37
    %v1137 = vand.u32 %v1124, 2147483648
    %v1138 = vor.u32 1.1754944e-38, %v1137
    %v1139 = vsel %vm1136, %v1138, %v1134
    %v1140 = vmul.f32 1.0, %v1139
    %v1141 = vrcp.pop %v1125
    %v1142 = vmul.f32 %v1125, %v1141
    %v1143 = vsub.f32 1.0, %v1142
    %v1144 = vmul.f32 %v1141, %v1143
    %v1145 = vadd.f32 %v1141, %v1144
    %vm1146 = vweird.f32 %v1125
    %vm1147 = vweird.f32 %v1141
    %vm1148 = vmor %vm1146, %vm1147
    %v1149 = vsel %vm1148, %v1141, %v1145
    %v1150 = vand.u32 2147483647, %v1125
    %vm1151 = vcmp.eq.f32.partialorder %v1150, 8.507059e+37
    %v1152 = vand.u32 %v1125, 2147483648
    %v1153 = vor.u32 1.1754944e-38, %v1152
    %v1154 = vsel %vm1151, %v1153, %v1149
    %v1155 = vmul.f32 1.0, %v1154
    %v1156 = vtanh.pop %v1117
    %v1157 = vmul.f32 %v1140, %v1044
    %1159 = vrot.lane.b32.xlu0 %v1156, 64
    %v1160 = vpop.permute.xlu0 %1159
    %v1162 = vmul.f32 %v1140, %v1160
    %1164 = vrot.lane.b32.xlu0 %v1162, 64
    %v1165 = vpop.permute.xlu0 %1164
    %v1167 = vadd.f32 %v1157, %v1165
    %v1168 = vtanh.pop %v1167
    %1170 = vrot.lane.b32.xlu0 %v1168, 64
    %v1171 = vpop.permute.xlu0 %1170
    %v1173 = vmul.f32 %v1155, %v1171
    %v1174 = vrot.slane %v382, 6
    %v1175 = vrot.slane %v405, 6
    %v1178 = vrot.slane %v385, 5
    %v1179 = vrot.slane %v408, 5
    %v1182 = vsel %vm263, %v1174, %v1178
    %v1183 = vsel %vm263, %v1175, %v1179
    %v1184 = vrot.slane %v436, 1
    %v1185 = vrot.slane %v459, 1
    %v1188 = vsel %vm263, %v1184, %v439
    %v1189 = vsel %vm263, %v1185, %v462
    %v1190 = vadd.f32 %v1182, %v1188
    %v1191 = vadd.f32 %v1183, %v1189
    %v1193 = vsel %vm580, %v1173, 0
    %1195 = vmatpush.msra.mxu0 0.0
    %1196 = vmatpush.msra.mxu0 0.0
    %1197 = vmatpush.msra.mxu0 0.0
    %1198 = vmatpush.msra.mxu0 0.0
    %1199 = vmatpush.msra.mxu0 0.0
    %1200 = vmatpush.msra.mxu0 0.0
    %1201 = vmatpush.msra.mxu0 0.0
    %1202 = vmatpush.msra.mxu0 0.0
    %1203 = vmatpush.msra.mxu0 %v478
    %1204 = vmatpush.msra.mxu0 %v476
    %1205 = vmatpush.msra.mxu0 %v474
    %1206 = vmatpush.msra.mxu0 %v472
    %1207 = vmatpush.msra.mxu0 %v470
    %1208 = vmatpush.msra.mxu0 %v468
    %1209 = vmatpush.msra.mxu0 %v466
    %1210 = vmatpush.msra.mxu0 %v464
    %1211 = vmatmul.f32.gmra.mxu0 %v1193
    %v1212 = vpop.f32.mrf.mxu0
    %v1213 = vadd.f32 0.0, %v1212
    %1214 = vdwg.mxu0
    %1215 = vmatpush.msra.mxu0 0.0
    %1216 = vmatpush.msra.mxu0 0.0
    %1217 = vmatpush.msra.mxu0 0.0
    %1218 = vmatpush.msra.mxu0 0.0
    %1219 = vmatpush.msra.mxu0 0.0
    %1220 = vmatpush.msra.mxu0 0.0
    %1221 = vmatpush.msra.mxu0 0.0
    %1222 = vmatpush.msra.mxu0 0.0
    %1223 = vmatpush.msra.mxu0 %v479
    %1224 = vmatpush.msra.mxu0 %v477
    %1225 = vmatpush.msra.mxu0 %v475
    %1226 = vmatpush.msra.mxu0 %v473
    %1227 = vmatpush.msra.mxu0 %v471
    %1228 = vmatpush.msra.mxu0 %v469
    %1229 = vmatpush.msra.mxu0 %v467
    %1230 = vmatpush.msra.mxu0 %v465
    %1231 = vmatmul.f32.gmra.mxu0 %v1193
    %v1232 = vpop.f32.mrf.mxu0
    %v1233 = vadd.f32 0.0, %v1232
    %1234 = vdwg.mxu0
    %v1235 = vadd.f32 %v1190, %v1213
    %v1236 = vadd.f32 %v1191, %v1233
    %v1237 = vxor.u32 %v1235, 2147483648
    %v1238 = vxor.u32 %v1236, 2147483648
    %v1239 = vmul.f32 %v1237, 1.442695
    %v1240 = vpow.pop %v1239
    %v1241 = vmul.f32 %v1238, 1.442695
    %v1242 = vpow.pop %v1241
    %v1243 = vadd.f32 %v1240, 1.0
    %v1244 = vadd.f32 %v1242, 1.0
    %v1245 = vrcp.pop %v1243
    %v1246 = vmul.f32 %v1243, %v1245
    %v1247 = vsub.f32 1.0, %v1246
    %v1248 = vmul.f32 %v1245, %v1247
    %v1249 = vadd.f32 %v1245, %v1248
    %vm1250 = vweird.f32 %v1243
    %vm1251 = vweird.f32 %v1245
    %vm1252 = vmor %vm1250, %vm1251
    %v1253 = vsel %vm1252, %v1245, %v1249
    %v1254 = vand.u32 2147483647, %v1243
    %vm1255 = vcmp.eq.f32.partialorder %v1254, 8.507059e+37
    %v1256 = vand.u32 %v1243, 2147483648
    %v1257 = vor.u32 1.1754944e-38, %v1256
    %v1258 = vsel %vm1255, %v1257, %v1253
    %v1259 = vmul.f32 1.0, %v1258
    %v1260 = vrcp.pop %v1244
    %v1261 = vmul.f32 %v1244, %v1260
    %v1262 = vsub.f32 1.0, %v1261
    %v1263 = vmul.f32 %v1260, %v1262
    %v1264 = vadd.f32 %v1260, %v1263
    %vm1265 = vweird.f32 %v1244
    %vm1266 = vweird.f32 %v1260
    %vm1267 = vmor %vm1265, %vm1266
    %v1268 = vsel %vm1267, %v1260, %v1264
    %v1269 = vand.u32 2147483647, %v1244
    %vm1270 = vcmp.eq.f32.partialorder %v1269, 8.507059e+37
    %v1271 = vand.u32 %v1244, 2147483648
    %v1272 = vor.u32 1.1754944e-38, %v1271
    %v1273 = vsel %vm1270, %v1272, %v1268
    %v1274 = vmul.f32 1.0, %v1273
    %v1275 = vtanh.pop %v1236
    %v1276 = vmul.f32 %v1259, %v1167
    %1278 = vrot.lane.b32.xlu0 %v1275, 64
    %v1279 = vpop.permute.xlu0 %1278
    %v1281 = vmul.f32 %v1259, %v1279
    %1283 = vrot.lane.b32.xlu0 %v1281, 64
    %v1284 = vpop.permute.xlu0 %1283
    %v1286 = vadd.f32 %v1276, %v1284
    %v1287 = vtanh.pop %v1286
    %1289 = vrot.lane.b32.xlu0 %v1287, 64
    %v1290 = vpop.permute.xlu0 %1289
    %v1292 = vmul.f32 %v1274, %v1290
    %v1293 = vrot.slane %v382, 7
    %v1294 = vrot.slane %v405, 7
    %v1297 = vrot.slane %v385, 6
    %v1298 = vrot.slane %v408, 6
    %v1301 = vsel %vm263, %v1293, %v1297
    %v1302 = vsel %vm263, %v1294, %v1298
    %v1303 = vrot.slane %v439, 7
    %v1304 = vrot.slane %v462, 7
    %v1307 = vsel %vm263, %v436, %v1303
    %v1308 = vsel %vm263, %v459, %v1304
    %v1309 = vadd.f32 %v1301, %v1307
    %v1310 = vadd.f32 %v1302, %v1308
    %v1312 = vsel %vm580, %v1292, 0
    %1314 = vmatpush.msra.mxu0 0.0
    %1315 = vmatpush.msra.mxu0 0.0
    %1316 = vmatpush.msra.mxu0 0.0
    %1317 = vmatpush.msra.mxu0 0.0
    %1318 = vmatpush.msra.mxu0 0.0
    %1319 = vmatpush.msra.mxu0 0.0
    %1320 = vmatpush.msra.mxu0 0.0
    %1321 = vmatpush.msra.mxu0 0.0
    %1322 = vmatpush.msra.mxu0 %v478
    %1323 = vmatpush.msra.mxu0 %v476
    %1324 = vmatpush.msra.mxu0 %v474
    %1325 = vmatpush.msra.mxu0 %v472
    %1326 = vmatpush.msra.mxu0 %v470
    %1327 = vmatpush.msra.mxu0 %v468
    %1328 = vmatpush.msra.mxu0 %v466
    %1329 = vmatpush.msra.mxu0 %v464
    %1330 = vmatmul.f32.gmra.mxu0 %v1312
    %v1331 = vpop.f32.mrf.mxu0
    %v1332 = vadd.f32 0.0, %v1331
    %1333 = vdwg.mxu0
    %1334 = vmatpush.msra.mxu0 0.0
    %1335 = vmatpush.msra.mxu0 0.0
    %1336 = vmatpush.msra.mxu0 0.0
    %1337 = vmatpush.msra.mxu0 0.0
    %1338 = vmatpush.msra.mxu0 0.0
    %1339 = vmatpush.msra.mxu0 0.0
    %1340 = vmatpush.msra.mxu0 0.0
    %1341 = vmatpush.msra.mxu0 0.0
    %1342 = vmatpush.msra.mxu0 %v479
    %1343 = vmatpush.msra.mxu0 %v477
    %1344 = vmatpush.msra.mxu0 %v475
    %1345 = vmatpush.msra.mxu0 %v473
    %1346 = vmatpush.msra.mxu0 %v471
    %1347 = vmatpush.msra.mxu0 %v469
    %1348 = vmatpush.msra.mxu0 %v467
    %1349 = vmatpush.msra.mxu0 %v465
    %1350 = vmatmul.f32.gmra.mxu0 %v1312
    %v1351 = vpop.f32.mrf.mxu0
    %v1352 = vadd.f32 0.0, %v1351
    %1353 = vdwg.mxu0
    %v1354 = vadd.f32 %v1309, %v1332
    %v1355 = vadd.f32 %v1310, %v1352
    %v1356 = vxor.u32 %v1354, 2147483648
    %v1357 = vxor.u32 %v1355, 2147483648
    %v1358 = vmul.f32 %v1356, 1.442695
    %v1359 = vpow.pop %v1358
    %v1360 = vmul.f32 %v1357, 1.442695
    %v1361 = vpow.pop %v1360
    %v1362 = vadd.f32 %v1359, 1.0
    %v1363 = vadd.f32 %v1361, 1.0
    %v1364 = vrcp.pop %v1362
    %v1365 = vmul.f32 %v1362, %v1364
    %v1366 = vsub.f32 1.0, %v1365
    %v1367 = vmul.f32 %v1364, %v1366
    %v1368 = vadd.f32 %v1364, %v1367
    %vm1369 = vweird.f32 %v1362
    %vm1370 = vweird.f32 %v1364
    %vm1371 = vmor %vm1369, %vm1370
    %v1372 = vsel %vm1371, %v1364, %v1368
    %v1373 = vand.u32 2147483647, %v1362
    %vm1374 = vcmp.eq.f32.partialorder %v1373, 8.507059e+37
    %v1375 = vand.u32 %v1362, 2147483648
    %v1376 = vor.u32 1.1754944e-38, %v1375
    %v1377 = vsel %vm1374, %v1376, %v1372
    %v1378 = vmul.f32 1.0, %v1377
    %v1379 = vrcp.pop %v1363
    %v1380 = vmul.f32 %v1363, %v1379
    %v1381 = vsub.f32 1.0, %v1380
    %v1382 = vmul.f32 %v1379, %v1381
    %v1383 = vadd.f32 %v1379, %v1382
    %vm1384 = vweird.f32 %v1363
    %vm1385 = vweird.f32 %v1379
    %vm1386 = vmor %vm1384, %vm1385
    %v1387 = vsel %vm1386, %v1379, %v1383
    %v1388 = vand.u32 2147483647, %v1363
    %vm1389 = vcmp.eq.f32.partialorder %v1388, 8.507059e+37
    %v1390 = vand.u32 %v1363, 2147483648
    %v1391 = vor.u32 1.1754944e-38, %v1390
    %v1392 = vsel %vm1389, %v1391, %v1387
    %v1393 = vmul.f32 1.0, %v1392
    %v1394 = vtanh.pop %v1355
    %v1395 = vmul.f32 %v1378, %v1286
    %1397 = vrot.lane.b32.xlu0 %v1394, 64
    %v1398 = vpop.permute.xlu0 %1397
    %v1400 = vmul.f32 %v1378, %v1398
    %1402 = vrot.lane.b32.xlu0 %v1400, 64
    %v1403 = vpop.permute.xlu0 %1402
    %v1405 = vadd.f32 %v1395, %v1403
    %v1406 = vtanh.pop %v1405
    %1408 = vrot.lane.b32.xlu0 %v1406, 64
    %v1409 = vpop.permute.xlu0 %1408
    %v1411 = vmul.f32 %v1393, %v1409
    %v1412 = vsel %vm357, %v559, %v1411
    %v1413 = vsel %vm357, %v681, %v1292
    %v1414 = vsel %vm357, %v804, %v1173
    %v1415 = vsel %vm357, %v927, %v1050
    %v1416 = vsel %vm357, %v1050, %v927
    %v1417 = vsel %vm357, %v1173, %v804
    %v1418 = vsel %vm357, %v1292, %v681
    %v1419 = vsel %vm357, %v1411, %v559
    %v1421 = vrot.slane %v1413, 6
    %v1424 = vrot.slane %v1414, 4
    %v1427 = vrot.slane %v1415, 2
    %v1430 = vrot.slane %v1417, 6
    %v1433 = vrot.slane %v1418, 4
    %v1436 = vrot.slane %v1419, 2
    %vm1438 = vcmask 1041408
    %v1439 = vsel %vm1438, %v1412, %v1421
    %vm1440 = vcmask 1043456
    %v1441 = vsel %vm1440, %v1439, %v1424
    %vm1442 = vcmask 1045504
    %v1443 = vsel %vm1442, %v1441, %v1427
    %v1444 = vsel %vm1438, %v1416, %v1430
    %v1445 = vsel %vm1440, %v1444, %v1433
    %v1446 = vsel %vm1442, %v1445, %v1436
    %v1447 = vld [vmem:[%s9] sm:$0xff]
    %v1448 = vld [vmem:[%s9 + $0x8] sm:$0xff]
    %v1449 = vld [vmem:[%s9 + $0x10] sm:$0xff]
    %v1450 = vld [vmem:[%s9 + $0x18] sm:$0xff]
    %v1451 = vld [vmem:[%s9 + $0x20] sm:$0xff]
    %v1452 = vld [vmem:[%s9 + $0x28] sm:$0xff]
    %v1453 = vld [vmem:[%s9 + $0x30] sm:$0xff]
    %v1454 = vld [vmem:[%s9 + $0x38] sm:$0xff]
    %v1456 = vsel %vm580, %v1443, 0
    %v1459 = vsel %vm580, %v1446, 0
    %1461 = vmatpush.msra.mxu0 0.0
    %1462 = vmatpush.msra.mxu0 0.0
    %1463 = vmatpush.msra.mxu0 0.0
    %1464 = vmatpush.msra.mxu0 0.0
    %1465 = vmatpush.msra.mxu0 0.0
    %1466 = vmatpush.msra.mxu0 0.0
    %1467 = vmatpush.msra.mxu0 0.0
    %1468 = vmatpush.msra.mxu0 0.0
    %1469 = vmatpush.msra.mxu0 %v1454
    %1470 = vmatpush.msra.mxu0 %v1453
    %1471 = vmatpush.msra.mxu0 %v1452
    %1472 = vmatpush.msra.mxu0 %v1451
    %1473 = vmatpush.msra.mxu0 %v1450
    %1474 = vmatpush.msra.mxu0 %v1449
    %1475 = vmatpush.msra.mxu0 %v1448
    %1476 = vmatpush.msra.mxu0 %v1447
    %1477 = vmatmul.f32.gmra.mxu0 %v1456
    %v1478 = vpop.f32.mrf.mxu0
    %v1479 = vadd.f32 0.0, %v1478
    %1480 = vmatmul.f32.gmra.mxu0 %v1459
    %v1481 = vpop.f32.mrf.mxu0
    %v1482 = vadd.f32 0.0, %v1481
    %1483 = vdwg.mxu0
    %vm1484 = vcmp.lt.s32.totalorder %v235, 0
    %v1485 = vsub.s32 0, %v235
    %v1486 = vsel %vm1484, %v1485, %v235
    %v1487 = vshrl.u32 %v1486, 1
    %v1488 = vand.u32 %v1486, 1
    %v1489 = vsub.s32 0, %v1488
    %v1490 = vsel %vm1484, %v1489, %v1488
    %vm1491 = vcmp.lt.s32.totalorder %v236, 0
    %v1492 = vsub.s32 0, %v236
    %v1493 = vsel %vm1491, %v1492, %v236
    %v1494 = vshrl.u32 %v1493, 1
    %v1495 = vand.u32 %v1493, 1
    %v1496 = vsub.s32 0, %v1495
    %v1497 = vsel %vm1491, %v1496, %v1495
    %vm1498 = vcmp.ne.s32.totalorder %v1490, 0
    %vm1499 = vcmp.ne.s32.totalorder %v1497, 0
    %vm1500 = vcmp.lt.s32.totalorder %v1490, 0
    %vm1501 = vcmp.lt.s32.totalorder %v1497, 0
    %vm1502 = vmand %vm1500, %vm1498
    %vm1503 = vmand %vm1501, %vm1499
    %v1504 = vadd.s32 %v1490, 2
    %v1505 = vadd.s32 %v1497, 2
    %v1506 = vsel %vm1502, %v1504, %v1490
    %v1507 = vsel %vm1503, %v1505, %v1497
    %vm1508 = vcmp.eq.s32.totalorder %v1506, 0
    %vm1509 = vcmp.eq.s32.totalorder %v1507, 0
    %v1510 = vsel %vm1508, %v1479, -inf
    %v1511 = vsel %vm1509, %v1482, -inf
    %vm1512 = vcmask 7168
    %v1513 = vsel %vm1512, %v1510, -inf
    %v1514 = vsel %vm1512, %v1511, -inf
    %v1515 = vmax.f32 %v1513, %v1514
    %1516 = vmax.xlane.f32.xlu0 %v1515
    %v1517 = vpop.xlane.xlu0 %1516
    %v1518 = vrot.slane %v1517, 4
    %v1519 = vmax.f32 %v1517, %v1518
    %v1520 = vrot.slane %v1519, 2
    %v1521 = vmax.f32 %v1519, %v1520
    %v1522 = vrot.slane %v1521, 1
    %v1523 = vmax.f32 %v1521, %v1522
    %s1524 = vtos %v1523
    %v1525 = vstv %s1524
    %v1526 = vsub.f32 %v1510, %v1525
    %v1527 = vsub.f32 %v1511, %v1525
    %v1528 = vmul.f32 %v1526, 1.442695
    %v1529 = vpow.pop %v1528
    %v1530 = vmul.f32 %v1527, 1.442695
    %v1531 = vpow.pop %v1530
    %v1532 = vsel %vm1512, %v1529, 0.0
    %v1533 = vsel %vm1512, %v1531, 0.0
    %v1534 = vadd.f32 %v1532, %v1533
    %1535 = vadd.xlane.f32.xlu0 %v1534
    %v1536 = vpop.xlane.xlu0 %1535
    %v1537 = vrot.slane %v1536, 4
    %v1538 = vadd.f32 %v1536, %v1537
    %v1539 = vrot.slane %v1538, 2
    %v1540 = vadd.f32 %v1538, %v1539
    %v1541 = vrot.slane %v1540, 1
    %v1542 = vadd.f32 %v1540, %v1541
    %s1543 = vtos %v1542
    %v1544 = vstv %s1543
    %v1545 = vrcp.pop %v1544
    %v1546 = vmul.f32 %v1544, %v1545
    %v1547 = vsub.f32 1.0, %v1546
    %v1548 = vmul.f32 %v1545, %v1547
    %v1549 = vadd.f32 %v1545, %v1548
    %vm1550 = vweird.f32 %v1544
    %vm1551 = vweird.f32 %v1545
    %vm1552 = vmor %vm1550, %vm1551
    %v1553 = vsel %vm1552, %v1545, %v1549
    %v1554 = vand.u32 2147483647, %v1544
    %vm1555 = vcmp.eq.f32.partialorder %v1554, 8.507059e+37
    %v1556 = vand.u32 %v1544, 2147483648
    %v1557 = vor.u32 1.1754944e-38, %v1556
    %v1558 = vsel %vm1555, %v1557, %v1553
    %v1559 = vmul.f32 %v1529, %v1558
    %v1560 = vmul.f32 %v1531, %v1558
    %1562 = vset.pattern.permute.xlu0 0
    %1563 = vperm.xlu0 %1562, %v1559
    %v1564 = vpop.permute.xlu0 %1563
    %1567 = vset.pattern.permute.xlu0 0
    %1568 = vperm.xlu0 %1567, %v1560
    %v1569 = vpop.permute.xlu0 %1568
    %v1571 = vmul.f32 %v1564, %v1443
    %v1572 = vmul.f32 %v1569, %v1446
    %v1573 = vsel %vm580, %v1571, 0.0
    %v1574 = vsel %vm580, %v1572, 0.0
    %v1575 = vadd.f32 %v1573, %v1574
    %v1576 = vrot.slane %v1575, 4
    %v1577 = vadd.f32 %v1575, %v1576
    %v1578 = vrot.slane %v1577, 2
    %v1579 = vadd.f32 %v1577, %v1578
    %v1580 = vrot.slane %v1579, 1
    %v1581 = vadd.f32 %v1579, %v1580
    %vm1582 = vcmp.eq.s32.totalorder %v1506, 1
    %vm1583 = vcmp.eq.s32.totalorder %v1507, 1
    %v1584 = vsel %vm1582, %v1479, -inf
    %v1585 = vsel %vm1583, %v1482, -inf
    %v1586 = vsel %vm1512, %v1584, -inf
    %v1587 = vsel %vm1512, %v1585, -inf
    %v1588 = vmax.f32 %v1586, %v1587
    %1589 = vmax.xlane.f32.xlu0 %v1588
    %v1590 = vpop.xlane.xlu0 %1589
    %v1591 = vrot.slane %v1590, 4
    %v1592 = vmax.f32 %v1590, %v1591
    %v1593 = vrot.slane %v1592, 2
    %v1594 = vmax.f32 %v1592, %v1593
    %v1595 = vrot.slane %v1594, 1
    %v1596 = vmax.f32 %v1594, %v1595
    %s1597 = vtos %v1596
    %v1598 = vstv %s1597
    %v1599 = vsub.f32 %v1584, %v1598
    %v1600 = vsub.f32 %v1585, %v1598
    %v1601 = vmul.f32 %v1599, 1.442695
    %v1602 = vpow.pop %v1601
    %v1603 = vmul.f32 %v1600, 1.442695
    %v1604 = vpow.pop %v1603
    %v1605 = vsel %vm1512, %v1602, 0.0
    %v1606 = vsel %vm1512, %v1604, 0.0
    %v1607 = vadd.f32 %v1605, %v1606
    %1608 = vadd.xlane.f32.xlu0 %v1607
    %v1609 = vpop.xlane.xlu0 %1608
    %v1610 = vrot.slane %v1609, 4
    %v1611 = vadd.f32 %v1609, %v1610
    %v1612 = vrot.slane %v1611, 2
    %v1613 = vadd.f32 %v1611, %v1612
    %v1614 = vrot.slane %v1613, 1
    %v1615 = vadd.f32 %v1613, %v1614
    %s1616 = vtos %v1615
    %v1617 = vstv %s1616
    %v1618 = vrcp.pop %v1617
    %v1619 = vmul.f32 %v1617, %v1618
    %v1620 = vsub.f32 1.0, %v1619
    %v1621 = vmul.f32 %v1618, %v1620
    %v1622 = vadd.f32 %v1618, %v1621
    %vm1623 = vweird.f32 %v1617
    %vm1624 = vweird.f32 %v1618
    %vm1625 = vmor %vm1623, %vm1624
    %v1626 = vsel %vm1625, %v1618, %v1622
    %v1627 = vand.u32 2147483647, %v1617
    %vm1628 = vcmp.eq.f32.partialorder %v1627, 8.507059e+37
    %v1629 = vand.u32 %v1617, 2147483648
    %v1630 = vor.u32 1.1754944e-38, %v1629
    %v1631 = vsel %vm1628, %v1630, %v1626
    %v1632 = vmul.f32 %v1602, %v1631
    %v1633 = vmul.f32 %v1604, %v1631
    %1635 = vset.pattern.permute.xlu0 0
    %1636 = vperm.xlu0 %1635, %v1632
    %v1637 = vpop.permute.xlu0 %1636
    %1640 = vset.pattern.permute.xlu0 0
    %1641 = vperm.xlu0 %1640, %v1633
    %v1642 = vpop.permute.xlu0 %1641
    %v1644 = vmul.f32 %v1637, %v1443
    %v1645 = vmul.f32 %v1642, %v1446
    %v1646 = vsel %vm580, %v1644, 0.0
    %v1647 = vsel %vm580, %v1645, 0.0
    %v1648 = vadd.f32 %v1646, %v1647
    %v1649 = vrot.slane %v1648, 4
    %v1650 = vadd.f32 %v1648, %v1649
    %v1651 = vrot.slane %v1650, 2
    %v1652 = vadd.f32 %v1650, %v1651
    %v1653 = vrot.slane %v1652, 1
    %v1654 = vadd.f32 %v1652, %v1653
    %v1655 = vsel %vm263, %v1581, %v1654
    %v1656 = vld [vmem:[%s10] sm:$0xff]
    %v1657 = vld [vmem:[%s10 + $0x8] sm:$0xff]
    %v1658 = vld [vmem:[%s10 + $0x10] sm:$0xff]
    %v1659 = vld [vmem:[%s10 + $0x18] sm:$0xff]
    %v1660 = vld [vmem:[%s10 + $0x20] sm:$0xff]
    %v1661 = vld [vmem:[%s10 + $0x28] sm:$0xff]
    %v1662 = vld [vmem:[%s10 + $0x30] sm:$0xff]
    %v1663 = vld [vmem:[%s10 + $0x38] sm:$0xff]
    %v1664 = vld [vmem:[%s11] sm:$0x1]
    %v1666 = vperm.slane %v1664, 0
    %v1669 = vsel %vm580, %v1655, 0
    %1671 = vmatpush.msra.mxu0 0.0
    %1672 = vmatpush.msra.mxu0 0.0
    %1673 = vmatpush.msra.mxu0 0.0
    %1674 = vmatpush.msra.mxu0 0.0
    %1675 = vmatpush.msra.mxu0 0.0
    %1676 = vmatpush.msra.mxu0 0.0
    %1677 = vmatpush.msra.mxu0 0.0
    %1678 = vmatpush.msra.mxu0 0.0
    %1679 = vmatpush.msra.mxu0 %v1663
    %1680 = vmatpush.msra.mxu0 %v1662
    %1681 = vmatpush.msra.mxu0 %v1661
    %1682 = vmatpush.msra.mxu0 %v1660
    %1683 = vmatpush.msra.mxu0 %v1659
    %1684 = vmatpush.msra.mxu0 %v1658
    %1685 = vmatpush.msra.mxu0 %v1657
    %1686 = vmatpush.msra.mxu0 %v1656
    %1687 = vmatmul.f32.gmra.mxu0 %v1669
    %v1688 = vpop.f32.mrf.mxu0
    %v1689 = vadd.f32 %v1666, %v1688
    %1690 = vdwg.mxu0
    %vm1691 = vcmask 41984
    %1692 = vst.msk [vmem:[#allocation2] sm:$0x3] %vm1691, %v1689
    // Predicated region
    $region50: #{axial_cls_forward.1} parent=1 // pred_check
      _
    $region51: #{axial_cls_forward.1} parent=1 // pred_check_branch
      %1694 = sbr.rel (0) target = $region53
    $region52: #{axial_cls_forward.1} parent=1 // pred_region
      %1696 = vsyncadd [#allocation3], 0
      %s1698 = sshll.u32 [#allocation2], 4
      %s1699 = int_to_ptr.vmem [resolvable:$true] %s1698
      %s1700 = sshll.u32 %s12, 4
      %s1701 = int_to_ptr.hbm [resolvable:$true] %s1700
      %1703 = dma.vmem_to_hbm [thread:$0]  %s1699, 32, %s1701, [#allocation3]
    $region53: #{axial_cls_forward.1} parent=1 // pred_fallthru
      _
    // Predicated region
    $region54: #{axial_cls_forward.1} parent=1 // pred_check
      _
    $region55: #{axial_cls_forward.1} parent=1 // pred_check_branch
      %1705 = sbr.rel (0) target = $region57
    $region56: #{axial_cls_forward.1} parent=1 // pred_region
      %1707 = dma.done [#allocation3], 32
    $region57: #{axial_cls_forward.1} parent=1 // pred_fallthru
      _
    %1708 = vsyncpa [#allocation3], 1

</llo_original>
